<compile_context>
chip_gen: v5e
topology: v5e:2x2
jax: 0.10.0
libtpu: 0.0.40
codegen_flags: <defaults>
</compile_context>

<pallas_src>
import jax
import jax.numpy as jnp
from jax.experimental import pallas as pl
from jax.experimental.pallas import tpu as pltpu

LANE = 128
SUBLANE = 8


def _round_up(n, m):
    return ((n + m - 1) // m) * m


def lstm_classifier_kernel(x_ref, wih_ref, whh_ref, b_ref, emb_ref,
                           fcw_ref, fcb_ref, out_ref, gx_ref):
    """One batch-block of the forward pass.

    x_ref   : (T, BB, Dp)    bf16   time-major, lane-padded input
    wih_ref : (Dp, 4*Hp)     bf16   (= weight_ih_l0.T, gate-blocked, zero-padded)
    whh_ref : (Hp, 4*Hp)     bf16   (= weight_hh_l0.T, gate-blocked, zero-padded)
    b_ref   : (1, 4*Hp)      f32    (= b_ih + b_hh, zero-padded)
    emb_ref : (BB, Hp)       f32    already-gathered patient embeddings
    fcw_ref : (Hp, Op)       bf16   (= fc.weight.T, zero-padded)
    fcb_ref : (1, Op)        f32
    out_ref : (BB, Op)       f32
    gx_ref  : (T, BB, 4*Hp)  f32    scratch: precomputed input projection (+bias)
    """
    T, BB, Dp = x_ref.shape
    Hp = whh_ref.shape[0]

    # --- Hoisted input projection: one big MXU matmul, bias folded in. ---
    x2d = x_ref[...].reshape(T * BB, Dp)
    gx = jnp.dot(x2d, wih_ref[...], preferred_element_type=jnp.float32)
    gx_ref[...] = (gx + b_ref[...]).reshape(T, BB, 4 * Hp)

    whh = whh_ref[...]  # keep resident in vregs across the loop

    def step(t, carry):
        h, c = carry
        gates = gx_ref[t] + jnp.dot(h.astype(whh.dtype), whh,
                                    preferred_element_type=jnp.float32)
        # Lane-aligned (Hp = 128) gate slices; gate order [i, f, g, o] as in nn.LSTM.
        i_g = jax.nn.sigmoid(gates[:, 0 * Hp:1 * Hp])
        f_g = jax.nn.sigmoid(gates[:, 1 * Hp:2 * Hp])
        g_g = jnp.tanh(gates[:, 2 * Hp:3 * Hp])
        o_g = jax.nn.sigmoid(gates[:, 3 * Hp:4 * Hp])
        c_new = f_g * c + i_g * g_g
        h_new = o_g * jnp.tanh(c_new)
        return (h_new, c_new)

    h0 = jnp.zeros((BB, Hp), jnp.float32)
    c0 = jnp.zeros((BB, Hp), jnp.float32)
    # Short static trip count -> fully unroll.
    h_last, _ = jax.lax.fori_loop(0, T, step, (h0, c0), unroll=True)

    # out[:, -1, :] + patient_embedding, then fc — lane-dense (BB, Op) store.
    feats = h_last + emb_ref[...]
    out_ref[...] = (jnp.dot(feats.astype(fcw_ref.dtype), fcw_ref[...],
                            preferred_element_type=jnp.float32)
                    + fcb_ref[...])


@jax.jit
def lstm_classifier_forward(x, patient_ids, params):
    """x: (B, T, D) float32, patient_ids: (B,) int32 -> (B, O) float32."""
    B, T, D = x.shape
    H = params["whh"].shape[1]
    O = params["fcw"].shape[0]

    Dp = _round_up(D, LANE)
    Hp = _round_up(H, LANE)
    Op = _round_up(O, LANE)
    Bp = _round_up(B, SUBLANE)
    if Bp > LANE:                      # keep Bp an exact multiple of the block
        Bp = _round_up(B, LANE)
    BB = min(Bp, LANE)                 # batch block per grid step

    # ---- Glue (cheap XLA ops): transpose, pad, cast, gather. ----
    x_tbd = jnp.transpose(x, (1, 0, 2))                                 # (T, B, D)
    x_p = jnp.pad(x_tbd, ((0, 0), (0, Bp - B), (0, Dp - D))).astype(jnp.bfloat16)

    # Gate-blocked, zero-padded weights: split the 4H axis into (4, Hp) so every gate
    # block starts on a 128-lane boundary.  Zero padding keeps padded hidden units at
    # exactly 0 through the recurrence (sigmoid(0)*0 / tanh(0) terms vanish).
    wih_p = jnp.pad(params["wih"].T.reshape(D, 4, H),
                    ((0, Dp - D), (0, 0), (0, Hp - H))
                    ).reshape(Dp, 4 * Hp).astype(jnp.bfloat16)
    whh_p = jnp.pad(params["whh"].T.reshape(H, 4, H),
                    ((0, Hp - H), (0, 0), (0, Hp - H))
                    ).reshape(Hp, 4 * Hp).astype(jnp.bfloat16)
    b_p = jnp.pad((params["b_ih"] + params["b_hh"]).reshape(4, H),
                  ((0, 0), (0, Hp - H))).reshape(1, 4 * Hp).astype(jnp.float32)

    # NOTE: jnp.take clamps out-of-range patient_ids (PyTorch nn.Embedding errors).
    emb = jnp.take(params["emb"], patient_ids, axis=0)                  # (B, H)
    emb_p = jnp.pad(emb, ((0, Bp - B), (0, Hp - H))).astype(jnp.float32)

    fcw_p = jnp.pad(params["fcw"].T, ((0, Hp - H), (0, Op - O))).astype(jnp.bfloat16)
    fcb_p = jnp.pad(params["fcb"].reshape(1, O),
                    ((0, 0), (0, Op - O))).astype(jnp.float32)

    out_p = pl.pallas_call(
        lstm_classifier_kernel,
        out_shape=jax.ShapeDtypeStruct((Bp, Op), jnp.float32),
        grid_spec=pltpu.PrefetchScalarGridSpec(
            num_scalar_prefetch=0,
            grid=(Bp // BB,),
            in_specs=[
                pl.BlockSpec((T, BB, Dp), lambda b: (0, b, 0)),      # x (time-major)
                pl.BlockSpec((Dp, 4 * Hp), lambda b: (0, 0)),        # W_ih^T
                pl.BlockSpec((Hp, 4 * Hp), lambda b: (0, 0)),        # W_hh^T
                pl.BlockSpec((1, 4 * Hp), lambda b: (0, 0)),         # bias
                pl.BlockSpec((BB, Hp), lambda b: (b, 0)),            # embeddings
                pl.BlockSpec((Hp, Op), lambda b: (0, 0)),            # fc.W^T
                pl.BlockSpec((1, Op), lambda b: (0, 0)),             # fc.b
            ],
            out_specs=pl.BlockSpec((BB, Op), lambda b: (b, 0)),
            scratch_shapes=[pltpu.VMEM((T, BB, 4 * Hp), jnp.float32)],
        ),
        compiler_params=pltpu.CompilerParams(
            dimension_semantics=("parallel",)),
    )(x_p, wih_p, whh_p, b_p, emb_p, fcw_p, fcb_p)

    return out_p[:B, :O]


def init_params(key, input_dim, hidden_dim, num_patients, output_dim):
    ks = jax.random.split(key, 7)
    s = 1.0 / jnp.sqrt(hidden_dim)
    return {
        # nn.LSTM parameter shapes (gate order i, f, g, o)
        "wih": jax.random.uniform(ks[0], (4 * hidden_dim, input_dim),
                                  jnp.float32, -s, s),
        "whh": jax.random.uniform(ks[1], (4 * hidden_dim, hidden_dim),
                                  jnp.float32, -s, s),
        "b_ih": jax.random.uniform(ks[2], (4 * hidden_dim,), jnp.float32, -s, s),
        "b_hh": jax.random.uniform(ks[3], (4 * hidden_dim,), jnp.float32, -s, s),
        # nn.Embedding(num_patients, hidden_dim)
        "emb": jax.random.normal(ks[4], (num_patients, hidden_dim), jnp.float32),
        # nn.Linear(hidden_dim, output_dim)
        "fcw": jax.random.uniform(ks[5], (output_dim, hidden_dim),
                                  jnp.float32, -s, s),
        "fcb": jax.random.uniform(ks[6], (output_dim,), jnp.float32, -s, s),
    }


if __name__ == "__main__":
    # Small shapes consistent with the module's forward (spec: input_dim=20, hidden=64).
    B, T, D = 4, 8, 20          # batch, seq, input_dim
    H = 64                      # hidden_dim
    NUM_PATIENTS = 10
    O = 2                       # output_dim

    key = jax.random.PRNGKey(0)
    k_x, k_id, k_p = jax.random.split(key, 3)

    x = jax.random.normal(k_x, (B, T, D), jnp.float32)
    patient_ids = jax.random.randint(k_id, (B,), 0, NUM_PATIENTS, jnp.int32)
    params = init_params(k_p, D, H, NUM_PATIENTS, O)

    out = lstm_classifier_forward(x, patient_ids, params)
    jax.block_until_ready(out)
    assert out.shape == (B, O) and out.dtype == jnp.float32
    print("KERNEL_OK")
</pallas_src>

<mosaic_0001>
module attributes {stable_mosaic.version = 11 : i64} {
  func.func @lstm_classifier_kernel(%arg0: i32, %arg1: memref<8x8x128xbf16, #tpu.memory_space<vmem>>, %arg2: memref<128x512xbf16, #tpu.memory_space<vmem>>, %arg3: memref<128x512xbf16, #tpu.memory_space<vmem>>, %arg4: memref<1x512xf32, #tpu.memory_space<vmem>>, %arg5: memref<8x128xf32, #tpu.memory_space<vmem>>, %arg6: memref<128x128xbf16, #tpu.memory_space<vmem>>, %arg7: memref<1x128xf32, #tpu.memory_space<vmem>>, %arg8: memref<8x128xf32, #tpu.memory_space<vmem>>, %arg9: memref<8x8x512xf32, #tpu.memory_space<vmem>>) attributes {dimension_semantics = [#tpu.dimension_semantics<parallel>], iteration_bounds = array<i64: 1>, scalar_prefetch = 0 : i64, scratch_operands = 1 : i64, tpu.core_type = #tpu.core_type<tc>, window_params = [{transform_indices = @transform_0, window_bounds = array<i64: 8, 8, 128>}, {pipeline_mode = #tpu.pipeline_mode<synchronous>, transform_indices = @transform_1, window_bounds = array<i64: 128, 512>}, {pipeline_mode = #tpu.pipeline_mode<synchronous>, transform_indices = @transform_2, window_bounds = array<i64: 128, 512>}, {pipeline_mode = #tpu.pipeline_mode<synchronous>, transform_indices = @transform_3, window_bounds = array<i64: 1, 512>}, {transform_indices = @transform_4, window_bounds = array<i64: 8, 128>}, {pipeline_mode = #tpu.pipeline_mode<synchronous>, transform_indices = @transform_5, window_bounds = array<i64: 128, 128>}, {pipeline_mode = #tpu.pipeline_mode<synchronous>, transform_indices = @transform_6, window_bounds = array<i64: 1, 128>}, {transform_indices = @transform_7, window_bounds = array<i64: 8, 128>}]} {
    %c0 = arith.constant 0 : index
    %c0_0 = arith.constant 0 : index
    %c0_1 = arith.constant 0 : index
    %0 = vector.load %arg1[%c0, %c0_0, %c0_1] : memref<8x8x128xbf16, #tpu.memory_space<vmem>>, vector<8x8x128xbf16>
    %1 = vector.shape_cast %0 : vector<8x8x128xbf16> to vector<64x128xbf16>
    %c0_2 = arith.constant 0 : index
    %c0_3 = arith.constant 0 : index
    %2 = vector.load %arg2[%c0_2, %c0_3] : memref<128x512xbf16, #tpu.memory_space<vmem>>, vector<128x512xbf16>
    %cst = arith.constant dense<0.000000e+00> : vector<64x512xf32>
    %3 = tpu.matmul %1, %2, %cst {dimension_numbers = #tpu.dot_dimension_numbers<[1], [0], [0], [1], [0, 0, 1, 1], [], []>} : vector<64x128xbf16>, vector<128x512xbf16>, vector<64x512xf32> -> vector<64x512xf32>
    %c0_4 = arith.constant 0 : index
    %c0_5 = arith.constant 0 : index
    %4 = vector.load %arg4[%c0_4, %c0_5] : memref<1x512xf32, #tpu.memory_space<vmem>>, vector<1x512xf32>
    %5 = vector.broadcast %4 : vector<1x512xf32> to vector<64x512xf32>
    %6 = arith.addf %3, %5 : vector<64x512xf32>
    %7 = vector.shape_cast %6 : vector<64x512xf32> to vector<8x8x512xf32>
    %c0_6 = arith.constant 0 : index
    %c0_7 = arith.constant 0 : index
    %c0_8 = arith.constant 0 : index
    %8 = vector.load %arg9[%c0_6, %c0_7, %c0_8] : memref<8x8x512xf32, #tpu.memory_space<vmem>>, vector<8x8x512xf32>
    tpu.vector_store %arg9[%c0_6, %c0_7, %c0_8], %7 {strides = array<i32>} : memref<8x8x512xf32, #tpu.memory_space<vmem>>, vector<8x8x512xf32>,
    %c0_9 = arith.constant 0 : index
    %c0_10 = arith.constant 0 : index
    %9 = vector.load %arg3[%c0_9, %c0_10] : memref<128x512xbf16, #tpu.memory_space<vmem>>, vector<128x512xbf16>
    %cst_11 = arith.constant 0.000000e+00 : f32
    %10 = vector.broadcast %cst_11 : f32 to vector<8x128xf32>
    %cst_12 = arith.constant 0.000000e+00 : f32
    %11 = vector.broadcast %cst_12 : f32 to vector<8x128xf32>
    %c0_i32 = arith.constant 0 : i32
    %12 = arith.index_cast %c0_i32 : i32 to index
    %c0_13 = arith.constant 0 : index
    %c0_14 = arith.constant 0 : index
    %13 = vector.load %arg9[%12, %c0_13, %c0_14] : memref<8x8x512xf32, #tpu.memory_space<vmem>>, vector<1x8x512xf32>
    %14 = vector.shape_cast %13 : vector<1x8x512xf32> to vector<8x512xf32>
    %15 = arith.truncf %10 : vector<8x128xf32> to vector<8x128xbf16>
    %cst_15 = arith.constant dense<0.000000e+00> : vector<8x512xf32>
    %16 = tpu.matmul %15, %9, %cst_15 {dimension_numbers = #tpu.dot_dimension_numbers<[1], [0], [0], [1], [0, 0, 1, 1], [], []>} : vector<8x128xbf16>, vector<128x512xbf16>, vector<8x512xf32> -> vector<8x512xf32>
    %17 = arith.addf %14, %16 : vector<8x512xf32>
    %18 = vector.extract_strided_slice %17 {offsets = [0, 0], sizes = [8, 128], strides = [1, 1]} : vector<8x512xf32> to vector<8x128xf32>
    %19 = arith.negf %18 : vector<8x128xf32>
    %20 = math.exp %19 : vector<8x128xf32>
    %cst_16 = arith.constant 1.000000e+00 : f32
    %21 = vector.broadcast %cst_16 : f32 to vector<8x128xf32>
    %22 = arith.addf %21, %20 : vector<8x128xf32>
    %23 = arith.divf %21, %22 : vector<8x128xf32>
    %24 = vector.extract_strided_slice %17 {offsets = [0, 128], sizes = [8, 128], strides = [1, 1]} : vector<8x512xf32> to vector<8x128xf32>
    %25 = arith.negf %24 : vector<8x128xf32>
    %26 = math.exp %25 : vector<8x128xf32>
    %cst_17 = arith.constant 1.000000e+00 : f32
    %27 = vector.broadcast %cst_17 : f32 to vector<8x128xf32>
    %28 = arith.addf %27, %26 : vector<8x128xf32>
    %29 = arith.divf %27, %28 : vector<8x128xf32>
    %30 = vector.extract_strided_slice %17 {offsets = [0, 256], sizes = [8, 128], strides = [1, 1]} : vector<8x512xf32> to vector<8x128xf32>
    %31 = math.tanh %30 : vector<8x128xf32>
    %32 = vector.extract_strided_slice %17 {offsets = [0, 384], sizes = [8, 128], strides = [1, 1]} : vector<8x512xf32> to vector<8x128xf32>
    %33 = arith.negf %32 : vector<8x128xf32>
    %34 = math.exp %33 : vector<8x128xf32>
    %cst_18 = arith.constant 1.000000e+00 : f32
    %35 = vector.broadcast %cst_18 : f32 to vector<8x128xf32>
    %36 = arith.addf %35, %34 : vector<8x128xf32>
    %37 = arith.divf %35, %36 : vector<8x128xf32>
    %38 = arith.mulf %29, %11 : vector<8x128xf32>
    %39 = arith.mulf %23, %31 : vector<8x128xf32>
    %40 = arith.addf %38, %39 : vector<8x128xf32>
    %41 = math.tanh %40 : vector<8x128xf32>
    %42 = arith.mulf %37, %41 : vector<8x128xf32>
    %c1_i32 = arith.constant 1 : i32
    %43 = arith.index_cast %c1_i32 : i32 to index
    %c0_19 = arith.constant 0 : index
    %c0_20 = arith.constant 0 : index
    %44 = vector.load %arg9[%43, %c0_19, %c0_20] : memref<8x8x512xf32, #tpu.memory_space<vmem>>, vector<1x8x512xf32>
    %45 = vector.shape_cast %44 : vector<1x8x512xf32> to vector<8x512xf32>
    %46 = arith.truncf %42 : vector<8x128xf32> to vector<8x128xbf16>
    %cst_21 = arith.constant dense<0.000000e+00> : vector<8x512xf32>
    %47 = tpu.matmul %46, %9, %cst_21 {dimension_numbers = #tpu.dot_dimension_numbers<[1], [0], [0], [1], [0, 0, 1, 1], [], []>} : vector<8x128xbf16>, vector<128x512xbf16>, vector<8x512xf32> -> vector<8x512xf32>
    %48 = arith.addf %45, %47 : vector<8x512xf32>
    %49 = vector.extract_strided_slice %48 {offsets = [0, 0], sizes = [8, 128], strides = [1, 1]} : vector<8x512xf32> to vector<8x128xf32>
    %50 = arith.negf %49 : vector<8x128xf32>
    %51 = math.exp %50 : vector<8x128xf32>
    %cst_22 = arith.constant 1.000000e+00 : f32
    %52 = vector.broadcast %cst_22 : f32 to vector<8x128xf32>
    %53 = arith.addf %52, %51 : vector<8x128xf32>
    %54 = arith.divf %52, %53 : vector<8x128xf32>
    %55 = vector.extract_strided_slice %48 {offsets = [0, 128], sizes = [8, 128], strides = [1, 1]} : vector<8x512xf32> to vector<8x128xf32>
    %56 = arith.negf %55 : vector<8x128xf32>
    %57 = math.exp %56 : vector<8x128xf32>
    %cst_23 = arith.constant 1.000000e+00 : f32
    %58 = vector.broadcast %cst_23 : f32 to vector<8x128xf32>
    %59 = arith.addf %58, %57 : vector<8x128xf32>
    %60 = arith.divf %58, %59 : vector<8x128xf32>
    %61 = vector.extract_strided_slice %48 {offsets = [0, 256], sizes = [8, 128], strides = [1, 1]} : vector<8x512xf32> to vector<8x128xf32>
    %62 = math.tanh %61 : vector<8x128xf32>
    %63 = vector.extract_strided_slice %48 {offsets = [0, 384], sizes = [8, 128], strides = [1, 1]} : vector<8x512xf32> to vector<8x128xf32>
    %64 = arith.negf %63 : vector<8x128xf32>
    %65 = math.exp %64 : vector<8x128xf32>
    %cst_24 = arith.constant 1.000000e+00 : f32
    %66 = vector.broadcast %cst_24 : f32 to vector<8x128xf32>
    %67 = arith.addf %66, %65 : vector<8x128xf32>
    %68 = arith.divf %66, %67 : vector<8x128xf32>
    %69 = arith.mulf %60, %40 : vector<8x128xf32>
    %70 = arith.mulf %54, %62 : vector<8x128xf32>
    %71 = arith.addf %69, %70 : vector<8x128xf32>
    %72 = math.tanh %71 : vector<8x128xf32>
    %73 = arith.mulf %68, %72 : vector<8x128xf32>
    %c2_i32 = arith.constant 2 : i32
    %74 = arith.index_cast %c2_i32 : i32 to index
    %c0_25 = arith.constant 0 : index
    %c0_26 = arith.constant 0 : index
    %75 = vector.load %arg9[%74, %c0_25, %c0_26] : memref<8x8x512xf32, #tpu.memory_space<vmem>>, vector<1x8x512xf32>
    %76 = vector.shape_cast %75 : vector<1x8x512xf32> to vector<8x512xf32>
    %77 = arith.truncf %73 : vector<8x128xf32> to vector<8x128xbf16>
    %cst_27 = arith.constant dense<0.000000e+00> : vector<8x512xf32>
    %78 = tpu.matmul %77, %9, %cst_27 {dimension_numbers = #tpu.dot_dimension_numbers<[1], [0], [0], [1], [0, 0, 1, 1], [], []>} : vector<8x128xbf16>, vector<128x512xbf16>, vector<8x512xf32> -> vector<8x512xf32>
    %79 = arith.addf %76, %78 : vector<8x512xf32>
    %80 = vector.extract_strided_slice %79 {offsets = [0, 0], sizes = [8, 128], strides = [1, 1]} : vector<8x512xf32> to vector<8x128xf32>
    %81 = arith.negf %80 : vector<8x128xf32>
    %82 = math.exp %81 : vector<8x128xf32>
    %cst_28 = arith.constant 1.000000e+00 : f32
    %83 = vector.broadcast %cst_28 : f32 to vector<8x128xf32>
    %84 = arith.addf %83, %82 : vector<8x128xf32>
    %85 = arith.divf %83, %84 : vector<8x128xf32>
    %86 = vector.extract_strided_slice %79 {offsets = [0, 128], sizes = [8, 128], strides = [1, 1]} : vector<8x512xf32> to vector<8x128xf32>
    %87 = arith.negf %86 : vector<8x128xf32>
    %88 = math.exp %87 : vector<8x128xf32>
    %cst_29 = arith.constant 1.000000e+00 : f32
    %89 = vector.broadcast %cst_29 : f32 to vector<8x128xf32>
    %90 = arith.addf %89, %88 : vector<8x128xf32>
    %91 = arith.divf %89, %90 : vector<8x128xf32>
    %92 = vector.extract_strided_slice %79 {offsets = [0, 256], sizes = [8, 128], strides = [1, 1]} : vector<8x512xf32> to vector<8x128xf32>
    %93 = math.tanh %92 : vector<8x128xf32>
    %94 = vector.extract_strided_slice %79 {offsets = [0, 384], sizes = [8, 128], strides = [1, 1]} : vector<8x512xf32> to vector<8x128xf32>
    %95 = arith.negf %94 : vector<8x128xf32>
    %96 = math.exp %95 : vector<8x128xf32>
    %cst_30 = arith.constant 1.000000e+00 : f32
    %97 = vector.broadcast %cst_30 : f32 to vector<8x128xf32>
    %98 = arith.addf %97, %96 : vector<8x128xf32>
    %99 = arith.divf %97, %98 : vector<8x128xf32>
    %100 = arith.mulf %91, %71 : vector<8x128xf32>
    %101 = arith.mulf %85, %93 : vector<8x128xf32>
    %102 = arith.addf %100, %101 : vector<8x128xf32>
    %103 = math.tanh %102 : vector<8x128xf32>
    %104 = arith.mulf %99, %103 : vector<8x128xf32>
    %c3_i32 = arith.constant 3 : i32
    %105 = arith.index_cast %c3_i32 : i32 to index
    %c0_31 = arith.constant 0 : index
    %c0_32 = arith.constant 0 : index
    %106 = vector.load %arg9[%105, %c0_31, %c0_32] : memref<8x8x512xf32, #tpu.memory_space<vmem>>, vector<1x8x512xf32>
    %107 = vector.shape_cast %106 : vector<1x8x512xf32> to vector<8x512xf32>
    %108 = arith.truncf %104 : vector<8x128xf32> to vector<8x128xbf16>
    %cst_33 = arith.constant dense<0.000000e+00> : vector<8x512xf32>
    %109 = tpu.matmul %108, %9, %cst_33 {dimension_numbers = #tpu.dot_dimension_numbers<[1], [0], [0], [1], [0, 0, 1, 1], [], []>} : vector<8x128xbf16>, vector<128x512xbf16>, vector<8x512xf32> -> vector<8x512xf32>
    %110 = arith.addf %107, %109 : vector<8x512xf32>
    %111 = vector.extract_strided_slice %110 {offsets = [0, 0], sizes = [8, 128], strides = [1, 1]} : vector<8x512xf32> to vector<8x128xf32>
    %112 = arith.negf %111 : vector<8x128xf32>
    %113 = math.exp %112 : vector<8x128xf32>
    %cst_34 = arith.constant 1.000000e+00 : f32
    %114 = vector.broadcast %cst_34 : f32 to vector<8x128xf32>
    %115 = arith.addf %114, %113 : vector<8x128xf32>
    %116 = arith.divf %114, %115 : vector<8x128xf32>
    %117 = vector.extract_strided_slice %110 {offsets = [0, 128], sizes = [8, 128], strides = [1, 1]} : vector<8x512xf32> to vector<8x128xf32>
    %118 = arith.negf %117 : vector<8x128xf32>
    %119 = math.exp %118 : vector<8x128xf32>
    %cst_35 = arith.constant 1.000000e+00 : f32
    %120 = vector.broadcast %cst_35 : f32 to vector<8x128xf32>
    %121 = arith.addf %120, %119 : vector<8x128xf32>
    %122 = arith.divf %120, %121 : vector<8x128xf32>
    %123 = vector.extract_strided_slice %110 {offsets = [0, 256], sizes = [8, 128], strides = [1, 1]} : vector<8x512xf32> to vector<8x128xf32>
    %124 = math.tanh %123 : vector<8x128xf32>
    %125 = vector.extract_strided_slice %110 {offsets = [0, 384], sizes = [8, 128], strides = [1, 1]} : vector<8x512xf32> to vector<8x128xf32>
    %126 = arith.negf %125 : vector<8x128xf32>
    %127 = math.exp %126 : vector<8x128xf32>
    %cst_36 = arith.constant 1.000000e+00 : f32
    %128 = vector.broadcast %cst_36 : f32 to vector<8x128xf32>
    %129 = arith.addf %128, %127 : vector<8x128xf32>
    %130 = arith.divf %128, %129 : vector<8x128xf32>
    %131 = arith.mulf %122, %102 : vector<8x128xf32>
    %132 = arith.mulf %116, %124 : vector<8x128xf32>
    %133 = arith.addf %131, %132 : vector<8x128xf32>
    %134 = math.tanh %133 : vector<8x128xf32>
    %135 = arith.mulf %130, %134 : vector<8x128xf32>
    %c4_i32 = arith.constant 4 : i32
    %136 = arith.index_cast %c4_i32 : i32 to index
    %c0_37 = arith.constant 0 : index
    %c0_38 = arith.constant 0 : index
    %137 = vector.load %arg9[%136, %c0_37, %c0_38] : memref<8x8x512xf32, #tpu.memory_space<vmem>>, vector<1x8x512xf32>
    %138 = vector.shape_cast %137 : vector<1x8x512xf32> to vector<8x512xf32>
    %139 = arith.truncf %135 : vector<8x128xf32> to vector<8x128xbf16>
    %cst_39 = arith.constant dense<0.000000e+00> : vector<8x512xf32>
    %140 = tpu.matmul %139, %9, %cst_39 {dimension_numbers = #tpu.dot_dimension_numbers<[1], [0], [0], [1], [0, 0, 1, 1], [], []>} : vector<8x128xbf16>, vector<128x512xbf16>, vector<8x512xf32> -> vector<8x512xf32>
    %141 = arith.addf %138, %140 : vector<8x512xf32>
    %142 = vector.extract_strided_slice %141 {offsets = [0, 0], sizes = [8, 128], strides = [1, 1]} : vector<8x512xf32> to vector<8x128xf32>
    %143 = arith.negf %142 : vector<8x128xf32>
    %144 = math.exp %143 : vector<8x128xf32>
    %cst_40 = arith.constant 1.000000e+00 : f32
    %145 = vector.broadcast %cst_40 : f32 to vector<8x128xf32>
    %146 = arith.addf %145, %144 : vector<8x128xf32>
    %147 = arith.divf %145, %146 : vector<8x128xf32>
    %148 = vector.extract_strided_slice %141 {offsets = [0, 128], sizes = [8, 128], strides = [1, 1]} : vector<8x512xf32> to vector<8x128xf32>
    %149 = arith.negf %148 : vector<8x128xf32>
    %150 = math.exp %149 : vector<8x128xf32>
    %cst_41 = arith.constant 1.000000e+00 : f32
    %151 = vector.broadcast %cst_41 : f32 to vector<8x128xf32>
    %152 = arith.addf %151, %150 : vector<8x128xf32>
    %153 = arith.divf %151, %152 : vector<8x128xf32>
    %154 = vector.extract_strided_slice %141 {offsets = [0, 256], sizes = [8, 128], strides = [1, 1]} : vector<8x512xf32> to vector<8x128xf32>
    %155 = math.tanh %154 : vector<8x128xf32>
    %156 = vector.extract_strided_slice %141 {offsets = [0, 384], sizes = [8, 128], strides = [1, 1]} : vector<8x512xf32> to vector<8x128xf32>
    %157 = arith.negf %156 : vector<8x128xf32>
    %158 = math.exp %157 : vector<8x128xf32>
    %cst_42 = arith.constant 1.000000e+00 : f32
    %159 = vector.broadcast %cst_42 : f32 to vector<8x128xf32>
    %160 = arith.addf %159, %158 : vector<8x128xf32>
    %161 = arith.divf %159, %160 : vector<8x128xf32>
    %162 = arith.mulf %153, %133 : vector<8x128xf32>
    %163 = arith.mulf %147, %155 : vector<8x128xf32>
    %164 = arith.addf %162, %163 : vector<8x128xf32>
    %165 = math.tanh %164 : vector<8x128xf32>
    %166 = arith.mulf %161, %165 : vector<8x128xf32>
    %c5_i32 = arith.constant 5 : i32
    %167 = arith.index_cast %c5_i32 : i32 to index
    %c0_43 = arith.constant 0 : index
    %c0_44 = arith.constant 0 : index
    %168 = vector.load %arg9[%167, %c0_43, %c0_44] : memref<8x8x512xf32, #tpu.memory_space<vmem>>, vector<1x8x512xf32>
    %169 = vector.shape_cast %168 : vector<1x8x512xf32> to vector<8x512xf32>
    %170 = arith.truncf %166 : vector<8x128xf32> to vector<8x128xbf16>
    %cst_45 = arith.constant dense<0.000000e+00> : vector<8x512xf32>
    %171 = tpu.matmul %170, %9, %cst_45 {dimension_numbers = #tpu.dot_dimension_numbers<[1], [0], [0], [1], [0, 0, 1, 1], [], []>} : vector<8x128xbf16>, vector<128x512xbf16>, vector<8x512xf32> -> vector<8x512xf32>
    %172 = arith.addf %169, %171 : vector<8x512xf32>
    %173 = vector.extract_strided_slice %172 {offsets = [0, 0], sizes = [8, 128], strides = [1, 1]} : vector<8x512xf32> to vector<8x128xf32>
    %174 = arith.negf %173 : vector<8x128xf32>
    %175 = math.exp %174 : vector<8x128xf32>
    %cst_46 = arith.constant 1.000000e+00 : f32
    %176 = vector.broadcast %cst_46 : f32 to vector<8x128xf32>
    %177 = arith.addf %176, %175 : vector<8x128xf32>
    %178 = arith.divf %176, %177 : vector<8x128xf32>
    %179 = vector.extract_strided_slice %172 {offsets = [0, 128], sizes = [8, 128], strides = [1, 1]} : vector<8x512xf32> to vector<8x128xf32>
    %180 = arith.negf %179 : vector<8x128xf32>
    %181 = math.exp %180 : vector<8x128xf32>
    %cst_47 = arith.constant 1.000000e+00 : f32
    %182 = vector.broadcast %cst_47 : f32 to vector<8x128xf32>
    %183 = arith.addf %182, %181 : vector<8x128xf32>
    %184 = arith.divf %182, %183 : vector<8x128xf32>
    %185 = vector.extract_strided_slice %172 {offsets = [0, 256], sizes = [8, 128], strides = [1, 1]} : vector<8x512xf32> to vector<8x128xf32>
    %186 = math.tanh %185 : vector<8x128xf32>
    %187 = vector.extract_strided_slice %172 {offsets = [0, 384], sizes = [8, 128], strides = [1, 1]} : vector<8x512xf32> to vector<8x128xf32>
    %188 = arith.negf %187 : vector<8x128xf32>
    %189 = math.exp %188 : vector<8x128xf32>
    %cst_48 = arith.constant 1.000000e+00 : f32
    %190 = vector.broadcast %cst_48 : f32 to vector<8x128xf32>
    %191 = arith.addf %190, %189 : vector<8x128xf32>
    %192 = arith.divf %190, %191 : vector<8x128xf32>
    %193 = arith.mulf %184, %164 : vector<8x128xf32>
    %194 = arith.mulf %178, %186 : vector<8x128xf32>
    %195 = arith.addf %193, %194 : vector<8x128xf32>
    %196 = math.tanh %195 : vector<8x128xf32>
    %197 = arith.mulf %192, %196 : vector<8x128xf32>
    %c6_i32 = arith.constant 6 : i32
    %198 = arith.index_cast %c6_i32 : i32 to index
    %c0_49 = arith.constant 0 : index
    %c0_50 = arith.constant 0 : index
    %199 = vector.load %arg9[%198, %c0_49, %c0_50] : memref<8x8x512xf32, #tpu.memory_space<vmem>>, vector<1x8x512xf32>
    %200 = vector.shape_cast %199 : vector<1x8x512xf32> to vector<8x512xf32>
    %201 = arith.truncf %197 : vector<8x128xf32> to vector<8x128xbf16>
    %cst_51 = arith.constant dense<0.000000e+00> : vector<8x512xf32>
    %202 = tpu.matmul %201, %9, %cst_51 {dimension_numbers = #tpu.dot_dimension_numbers<[1], [0], [0], [1], [0, 0, 1, 1], [], []>} : vector<8x128xbf16>, vector<128x512xbf16>, vector<8x512xf32> -> vector<8x512xf32>
    %203 = arith.addf %200, %202 : vector<8x512xf32>
    %204 = vector.extract_strided_slice %203 {offsets = [0, 0], sizes = [8, 128], strides = [1, 1]} : vector<8x512xf32> to vector<8x128xf32>
    %205 = arith.negf %204 : vector<8x128xf32>
    %206 = math.exp %205 : vector<8x128xf32>
    %cst_52 = arith.constant 1.000000e+00 : f32
    %207 = vector.broadcast %cst_52 : f32 to vector<8x128xf32>
    %208 = arith.addf %207, %206 : vector<8x128xf32>
    %209 = arith.divf %207, %208 : vector<8x128xf32>
    %210 = vector.extract_strided_slice %203 {offsets = [0, 128], sizes = [8, 128], strides = [1, 1]} : vector<8x512xf32> to vector<8x128xf32>
    %211 = arith.negf %210 : vector<8x128xf32>
    %212 = math.exp %211 : vector<8x128xf32>
    %cst_53 = arith.constant 1.000000e+00 : f32
    %213 = vector.broadcast %cst_53 : f32 to vector<8x128xf32>
    %214 = arith.addf %213, %212 : vector<8x128xf32>
    %215 = arith.divf %213, %214 : vector<8x128xf32>
    %216 = vector.extract_strided_slice %203 {offsets = [0, 256], sizes = [8, 128], strides = [1, 1]} : vector<8x512xf32> to vector<8x128xf32>
    %217 = math.tanh %216 : vector<8x128xf32>
    %218 = vector.extract_strided_slice %203 {offsets = [0, 384], sizes = [8, 128], strides = [1, 1]} : vector<8x512xf32> to vector<8x128xf32>
    %219 = arith.negf %218 : vector<8x128xf32>
    %220 = math.exp %219 : vector<8x128xf32>
    %cst_54 = arith.constant 1.000000e+00 : f32
    %221 = vector.broadcast %cst_54 : f32 to vector<8x128xf32>
    %222 = arith.addf %221, %220 : vector<8x128xf32>
    %223 = arith.divf %221, %222 : vector<8x128xf32>
    %224 = arith.mulf %215, %195 : vector<8x128xf32>
    %225 = arith.mulf %209, %217 : vector<8x128xf32>
    %226 = arith.addf %224, %225 : vector<8x128xf32>
    %227 = math.tanh %226 : vector<8x128xf32>
    %228 = arith.mulf %223, %227 : vector<8x128xf32>
    %c7_i32 = arith.constant 7 : i32
    %229 = arith.index_cast %c7_i32 : i32 to index
    %c0_55 = arith.constant 0 : index
    %c0_56 = arith.constant 0 : index
    %230 = vector.load %arg9[%229, %c0_55, %c0_56] : memref<8x8x512xf32, #tpu.memory_space<vmem>>, vector<1x8x512xf32>
    %231 = vector.shape_cast %230 : vector<1x8x512xf32> to vector<8x512xf32>
    %232 = arith.truncf %228 : vector<8x128xf32> to vector<8x128xbf16>
    %cst_57 = arith.constant dense<0.000000e+00> : vector<8x512xf32>
    %233 = tpu.matmul %232, %9, %cst_57 {dimension_numbers = #tpu.dot_dimension_numbers<[1], [0], [0], [1], [0, 0, 1, 1], [], []>} : vector<8x128xbf16>, vector<128x512xbf16>, vector<8x512xf32> -> vector<8x512xf32>
    %234 = arith.addf %231, %233 : vector<8x512xf32>
    %235 = vector.extract_strided_slice %234 {offsets = [0, 0], sizes = [8, 128], strides = [1, 1]} : vector<8x512xf32> to vector<8x128xf32>
    %236 = arith.negf %235 : vector<8x128xf32>
    %237 = math.exp %236 : vector<8x128xf32>
    %cst_58 = arith.constant 1.000000e+00 : f32
    %238 = vector.broadcast %cst_58 : f32 to vector<8x128xf32>
    %239 = arith.addf %238, %237 : vector<8x128xf32>
    %240 = arith.divf %238, %239 : vector<8x128xf32>
    %241 = vector.extract_strided_slice %234 {offsets = [0, 128], sizes = [8, 128], strides = [1, 1]} : vector<8x512xf32> to vector<8x128xf32>
    %242 = arith.negf %241 : vector<8x128xf32>
    %243 = math.exp %242 : vector<8x128xf32>
    %cst_59 = arith.constant 1.000000e+00 : f32
    %244 = vector.broadcast %cst_59 : f32 to vector<8x128xf32>
    %245 = arith.addf %244, %243 : vector<8x128xf32>
    %246 = arith.divf %244, %245 : vector<8x128xf32>
    %247 = vector.extract_strided_slice %234 {offsets = [0, 256], sizes = [8, 128], strides = [1, 1]} : vector<8x512xf32> to vector<8x128xf32>
    %248 = math.tanh %247 : vector<8x128xf32>
    %249 = vector.extract_strided_slice %234 {offsets = [0, 384], sizes = [8, 128], strides = [1, 1]} : vector<8x512xf32> to vector<8x128xf32>
    %250 = arith.negf %249 : vector<8x128xf32>
    %251 = math.exp %250 : vector<8x128xf32>
    %cst_60 = arith.constant 1.000000e+00 : f32
    %252 = vector.broadcast %cst_60 : f32 to vector<8x128xf32>
    %253 = arith.addf %252, %251 : vector<8x128xf32>
    %254 = arith.divf %252, %253 : vector<8x128xf32>
    %255 = arith.mulf %246, %226 : vector<8x128xf32>
    %256 = arith.mulf %240, %248 : vector<8x128xf32>
    %257 = arith.addf %255, %256 : vector<8x128xf32>
    %258 = math.tanh %257 : vector<8x128xf32>
    %259 = arith.mulf %254, %258 : vector<8x128xf32>
    %c8_i32 = arith.constant 8 : i32
    %c0_61 = arith.constant 0 : index
    %c0_62 = arith.constant 0 : index
    %260 = vector.load %arg5[%c0_61, %c0_62] : memref<8x128xf32, #tpu.memory_space<vmem>>, vector<8x128xf32>
    %261 = arith.addf %259, %260 : vector<8x128xf32>
    %262 = arith.truncf %261 : vector<8x128xf32> to vector<8x128xbf16>
    %c0_63 = arith.constant 0 : index
    %c0_64 = arith.constant 0 : index
    %263 = vector.load %arg6[%c0_63, %c0_64] : memref<128x128xbf16, #tpu.memory_space<vmem>>, vector<128x128xbf16>
    %cst_65 = arith.constant dense<0.000000e+00> : vector<8x128xf32>
    %264 = tpu.matmul %262, %263, %cst_65 {dimension_numbers = #tpu.dot_dimension_numbers<[1], [0], [0], [1], [0, 0, 1, 1], [], []>} : vector<8x128xbf16>, vector<128x128xbf16>, vector<8x128xf32> -> vector<8x128xf32>
    %c0_66 = arith.constant 0 : index
    %c0_67 = arith.constant 0 : index
    %265 = vector.load %arg7[%c0_66, %c0_67] : memref<1x128xf32, #tpu.memory_space<vmem>>, vector<1x128xf32>
    %266 = vector.broadcast %265 : vector<1x128xf32> to vector<8x128xf32>
    %267 = arith.addf %264, %266 : vector<8x128xf32>
    %c0_68 = arith.constant 0 : index
    %c0_69 = arith.constant 0 : index
    %268 = vector.load %arg8[%c0_68, %c0_69] : memref<8x128xf32, #tpu.memory_space<vmem>>, vector<8x128xf32>
    tpu.vector_store %arg8[%c0_68, %c0_69], %267 {strides = array<i32>} : memref<8x128xf32, #tpu.memory_space<vmem>>, vector<8x128xf32>,
    return
  }
  func.func @transform_0(%arg0: i32) -> (i32, i32, i32) {
    %c0_i32 = arith.constant 0 : i32
    %c0_i32_0 = arith.constant 0 : i32
    %c0_i32_1 = arith.constant 0 : i32
    return %c0_i32, %arg0, %c0_i32_0 : i32, i32, i32
  }
  func.func @transform_1(%arg0: i32) -> (i32, i32) {
    %c0_i32 = arith.constant 0 : i32
    %c0_i32_0 = arith.constant 0 : i32
    %c0_i32_1 = arith.constant 0 : i32
    return %c0_i32, %c0_i32_0 : i32, i32
  }
  func.func @transform_2(%arg0: i32) -> (i32, i32) {
    %c0_i32 = arith.constant 0 : i32
    %c0_i32_0 = arith.constant 0 : i32
    %c0_i32_1 = arith.constant 0 : i32
    return %c0_i32, %c0_i32_0 : i32, i32
  }
  func.func @transform_3(%arg0: i32) -> (i32, i32) {
    %c0_i32 = arith.constant 0 : i32
    %c0_i32_0 = arith.constant 0 : i32
    %c0_i32_1 = arith.constant 0 : i32
    return %c0_i32, %c0_i32_0 : i32, i32
  }
  func.func @transform_4(%arg0: i32) -> (i32, i32) {
    %c0_i32 = arith.constant 0 : i32
    %c0_i32_0 = arith.constant 0 : i32
    return %arg0, %c0_i32 : i32, i32
  }
  func.func @transform_5(%arg0: i32) -> (i32, i32) {
    %c0_i32 = arith.constant 0 : i32
    %c0_i32_0 = arith.constant 0 : i32
    %c0_i32_1 = arith.constant 0 : i32
    return %c0_i32, %c0_i32_0 : i32, i32
  }
  func.func @transform_6(%arg0: i32) -> (i32, i32) {
    %c0_i32 = arith.constant 0 : i32
    %c0_i32_0 = arith.constant 0 : i32
    %c0_i32_1 = arith.constant 0 : i32
    return %c0_i32, %c0_i32_0 : i32, i32
  }
  func.func @transform_7(%arg0: i32) -> (i32, i32) {
    %c0_i32 = arith.constant 0 : i32
    %c0_i32_0 = arith.constant 0 : i32
    return %arg0, %c0_i32 : i32, i32
  }
}

</mosaic_0001>

<llo_original>
// kernel: lstm_classifier_forward.1
$region0: #{lstm_classifier_forward.1}
  #allocation0 [shape = 'u32[]', space=smem, size = 0x4, offset = 0x4, fixed_abs, tag = 'smem constant byte address 0x4 - core index']
  #allocation1 [shape = 'u32[72,128]{1,0:T(1,128)}', space=vmem, size = 0x9000, scoped, tag = 'internal scratch']
  #allocation2 [shape = 'f32[8,8,512]{2,1,0:T(8,128)}', space=vmem, size = 0x20000, scoped, tag = 'scratch operand']
  %s0 = inlined_call_operand.vmem [shape: bf16[8,8,128], index: 0, kind: input, shape index: {}]
  %s1 = inlined_call_operand.vmem [shape: bf16[128,512], index: 1, kind: input, shape index: {}]
  %s2 = inlined_call_operand.vmem [shape: bf16[128,512], index: 2, kind: input, shape index: {}]
  %s3 = inlined_call_operand.vmem [shape: f32[1,512], index: 3, kind: input, shape index: {}]
  %s4 = inlined_call_operand.vmem [shape: f32[8,128], index: 4, kind: input, shape index: {}]
  %s5 = inlined_call_operand.vmem [shape: bf16[128,128], index: 5, kind: input, shape index: {}]
  %s6 = inlined_call_operand.vmem [shape: f32[1,128], index: 6, kind: input, shape index: {}]
  %s7 = inlined_call_operand.vmem [shape: f32[8,128], index: 7, kind: output, shape index: {}]
  %s8 = sld [smem:[#allocation0]]
  $region38: #{lstm_classifier_forward.1} parent=0
    _
  %s10 = ssub.s32 1, %s8
  %s11 = scalar_select 0, %s10, %s8
  // Predicated region
  $region2: #{lstm_classifier_forward.1} parent=0 // pred_check
    _
  $region3: #{lstm_classifier_forward.1} parent=0 // pred_check_branch
    %13 = sbr.rel (0) target = $region5
  $region4: #{lstm_classifier_forward.1} parent=0 // pred_region
    _
  $region5: #{lstm_classifier_forward.1} parent=0 // pred_fallthru
    _
  // Predicated region
  $region6: #{lstm_classifier_forward.1} parent=0 // pred_check
    _
  $region7: #{lstm_classifier_forward.1} parent=0 // pred_check_branch
    %15 = sbr.rel (0) target = $region9
  $region8: #{lstm_classifier_forward.1} parent=0 // pred_region
    _
  $region9: #{lstm_classifier_forward.1} parent=0 // pred_fallthru
    _
  // Predicated region
  $region10: #{lstm_classifier_forward.1} parent=0 // pred_check
    _
  $region11: #{lstm_classifier_forward.1} parent=0 // pred_check_branch
    %17 = sbr.rel (0) target = $region13
  $region12: #{lstm_classifier_forward.1} parent=0 // pred_region
    _
  $region13: #{lstm_classifier_forward.1} parent=0 // pred_fallthru
    _
  // Predicated region
  $region14: #{lstm_classifier_forward.1} parent=0 // pred_check
    _
  $region15: #{lstm_classifier_forward.1} parent=0 // pred_check_branch
    %19 = sbr.rel (0) target = $region17
  $region16: #{lstm_classifier_forward.1} parent=0 // pred_region
    _
  $region17: #{lstm_classifier_forward.1} parent=0 // pred_fallthru
    _
  // Predicated region
  $region18: #{lstm_classifier_forward.1} parent=0 // pred_check
    _
  $region19: #{lstm_classifier_forward.1} parent=0 // pred_check_branch
    %21 = sbr.rel (0) target = $region21
  $region20: #{lstm_classifier_forward.1} parent=0 // pred_region
    _
  $region21: #{lstm_classifier_forward.1} parent=0 // pred_fallthru
    _
  // Predicated region
  $region22: #{lstm_classifier_forward.1} parent=0 // pred_check
    _
  $region23: #{lstm_classifier_forward.1} parent=0 // pred_check_branch
    %23 = sbr.rel (0) target = $region25
  $region24: #{lstm_classifier_forward.1} parent=0 // pred_region
    _
  $region25: #{lstm_classifier_forward.1} parent=0 // pred_fallthru
    _
  // Predicated region
  $region26: #{lstm_classifier_forward.1} parent=0 // pred_check
    _
  $region27: #{lstm_classifier_forward.1} parent=0 // pred_check_branch
    %25 = sbr.rel (0) target = $region29
  $region28: #{lstm_classifier_forward.1} parent=0 // pred_region
    _
  $region29: #{lstm_classifier_forward.1} parent=0 // pred_fallthru
    _
  %v27 = vld [vmem:[%s0] sm:$0xf]
  %v28 = vld [vmem:[%s0 + $0x4] sm:$0xf]
  %v29 = vld [vmem:[%s0 + $0x8] sm:$0xf]
  %v30 = vld [vmem:[%s0 + $0xc] sm:$0xf]
  %v31 = vld [vmem:[%s0 + $0x10] sm:$0xf]
  %v32 = vld [vmem:[%s0 + $0x14] sm:$0xf]
  %v33 = vld [vmem:[%s0 + $0x18] sm:$0xf]
  %v34 = vld [vmem:[%s0 + $0x1c] sm:$0xf]
  %v35 = vld [vmem:[%s1] sm:$0xff]
  %v36 = vld [vmem:[%s1 + $0x8] sm:$0xff]
  %v37 = vld [vmem:[%s1 + $0x10] sm:$0xff]
  %v38 = vld [vmem:[%s1 + $0x18] sm:$0xff]
  %v39 = vld [vmem:[%s1 + $0x20] sm:$0xff]
  %v40 = vld [vmem:[%s1 + $0x28] sm:$0xff]
  %v41 = vld [vmem:[%s1 + $0x30] sm:$0xff]
  %v42 = vld [vmem:[%s1 + $0x38] sm:$0xff]
  %v43 = vld [vmem:[%s1 + $0x40] sm:$0xff]
  %v44 = vld [vmem:[%s1 + $0x48] sm:$0xff]
  %v45 = vld [vmem:[%s1 + $0x50] sm:$0xff]
  %v46 = vld [vmem:[%s1 + $0x58] sm:$0xff]
  %v47 = vld [vmem:[%s1 + $0x60] sm:$0xff]
  %v48 = vld [vmem:[%s1 + $0x68] sm:$0xff]
  %v49 = vld [vmem:[%s1 + $0x70] sm:$0xff]
  %v50 = vld [vmem:[%s1 + $0x78] sm:$0xff]
  %v51 = vld [vmem:[%s1 + $0x80] sm:$0xff]
  %v52 = vld [vmem:[%s1 + $0x88] sm:$0xff]
  %v53 = vld [vmem:[%s1 + $0x90] sm:$0xff]
  %v54 = vld [vmem:[%s1 + $0x98] sm:$0xff]
  %v55 = vld [vmem:[%s1 + $0xa0] sm:$0xff]
  %v56 = vld [vmem:[%s1 + $0xa8] sm:$0xff]
  %v57 = vld [vmem:[%s1 + $0xb0] sm:$0xff]
  %v58 = vld [vmem:[%s1 + $0xb8] sm:$0xff]
  %v59 = vld [vmem:[%s1 + $0xc0] sm:$0xff]
  %v60 = vld [vmem:[%s1 + $0xc8] sm:$0xff]
  %v61 = vld [vmem:[%s1 + $0xd0] sm:$0xff]
  %v62 = vld [vmem:[%s1 + $0xd8] sm:$0xff]
  %v63 = vld [vmem:[%s1 + $0xe0] sm:$0xff]
  %v64 = vld [vmem:[%s1 + $0xe8] sm:$0xff]
  %v65 = vld [vmem:[%s1 + $0xf0] sm:$0xff]
  %v66 = vld [vmem:[%s1 + $0xf8] sm:$0xff]
  %v67 = vld [vmem:[%s3] sm:$0xf]
  %v69 = vperm.slane %v67, 0
  %v70 = vperm.slane %v67, 1
  %v71 = vperm.slane %v67, 2
  %v72 = vperm.slane %v67, 3
  %v85 = vunpack.c.l.b16 %v27
  %v86 = vunpack.c.l.b16 %v28
  %v87 = vunpack.c.l.b16 %v29
  %v88 = vunpack.c.l.b16 %v30
  %v89 = vunpack.c.l.b16 %v31
  %v90 = vunpack.c.l.b16 %v32
  %v91 = vunpack.c.l.b16 %v33
  %v92 = vunpack.c.l.b16 %v34
  %v93 = vpack.c.b16 %v86, %v85
  %v94 = vpack.c.b16 %v88, %v87
  %v95 = vpack.c.b16 %v90, %v89
  %v96 = vpack.c.b16 %v92, %v91
  %v133 = vunpack.c.l.b16 %v35
  %v134 = vunpack.c.h.b16 %v35
  %v135 = vunpack.c.l.b16 %v36
  %v136 = vunpack.c.h.b16 %v36
  %v137 = vunpack.c.l.b16 %v37
  %v138 = vunpack.c.h.b16 %v37
  %v139 = vunpack.c.l.b16 %v38
  %v140 = vunpack.c.h.b16 %v38
  %v141 = vunpack.c.l.b16 %v39
  %v142 = vunpack.c.h.b16 %v39
  %v143 = vunpack.c.l.b16 %v40
  %v144 = vunpack.c.h.b16 %v40
  %v145 = vunpack.c.l.b16 %v41
  %v146 = vunpack.c.h.b16 %v41
  %v147 = vunpack.c.l.b16 %v42
  %v148 = vunpack.c.h.b16 %v42
  %v149 = vunpack.c.l.b16 %v43
  %v150 = vunpack.c.h.b16 %v43
  %v151 = vunpack.c.l.b16 %v44
  %v152 = vunpack.c.h.b16 %v44
  %v153 = vunpack.c.l.b16 %v45
  %v154 = vunpack.c.h.b16 %v45
  %v155 = vunpack.c.l.b16 %v46
  %v156 = vunpack.c.h.b16 %v46
  %v157 = vunpack.c.l.b16 %v47
  %v158 = vunpack.c.h.b16 %v47
  %v159 = vunpack.c.l.b16 %v48
  %v160 = vunpack.c.h.b16 %v48
  %v161 = vunpack.c.l.b16 %v49
  %v162 = vunpack.c.h.b16 %v49
  %v163 = vunpack.c.l.b16 %v50
  %v164 = vunpack.c.h.b16 %v50
  %v165 = vunpack.c.l.b16 %v51
  %v166 = vunpack.c.h.b16 %v51
  %v167 = vunpack.c.l.b16 %v52
  %v168 = vunpack.c.h.b16 %v52
  %v169 = vunpack.c.l.b16 %v53
  %v170 = vunpack.c.h.b16 %v53
  %v171 = vunpack.c.l.b16 %v54
  %v172 = vunpack.c.h.b16 %v54
  %v173 = vunpack.c.l.b16 %v55
  %v174 = vunpack.c.h.b16 %v55
  %v175 = vunpack.c.l.b16 %v56
  %v176 = vunpack.c.h.b16 %v56
  %v177 = vunpack.c.l.b16 %v57
  %v178 = vunpack.c.h.b16 %v57
  %v179 = vunpack.c.l.b16 %v58
  %v180 = vunpack.c.h.b16 %v58
  %v181 = vunpack.c.l.b16 %v59
  %v182 = vunpack.c.h.b16 %v59
  %v183 = vunpack.c.l.b16 %v60
  %v184 = vunpack.c.h.b16 %v60
  %v185 = vunpack.c.l.b16 %v61
  %v186 = vunpack.c.h.b16 %v61
  %v187 = vunpack.c.l.b16 %v62
  %v188 = vunpack.c.h.b16 %v62
  %v189 = vunpack.c.l.b16 %v63
  %v190 = vunpack.c.h.b16 %v63
  %v191 = vunpack.c.l.b16 %v64
  %v192 = vunpack.c.h.b16 %v64
  %v193 = vunpack.c.l.b16 %v65
  %v194 = vunpack.c.h.b16 %v65
  %v195 = vunpack.c.l.b16 %v66
  %v196 = vunpack.c.h.b16 %v66
  %v197 = vpack.c.b16 %v137, %v133
  %v198 = vpack.c.b16 %v138, %v134
  %v199 = vpack.c.b16 %v139, %v135
  %v200 = vpack.c.b16 %v140, %v136
  %v201 = vpack.c.b16 %v145, %v141
  %v202 = vpack.c.b16 %v146, %v142
  %v203 = vpack.c.b16 %v147, %v143
  %v204 = vpack.c.b16 %v148, %v144
  %v205 = vpack.c.b16 %v153, %v149
  %v206 = vpack.c.b16 %v154, %v150
  %v207 = vpack.c.b16 %v155, %v151
  %v208 = vpack.c.b16 %v156, %v152
  %v209 = vpack.c.b16 %v161, %v157
  %v210 = vpack.c.b16 %v162, %v158
  %v211 = vpack.c.b16 %v163, %v159
  %v212 = vpack.c.b16 %v164, %v160
  %v213 = vpack.c.b16 %v169, %v165
  %v214 = vpack.c.b16 %v170, %v166
  %v215 = vpack.c.b16 %v171, %v167
  %v216 = vpack.c.b16 %v172, %v168
  %v217 = vpack.c.b16 %v177, %v173
  %v218 = vpack.c.b16 %v178, %v174
  %v219 = vpack.c.b16 %v179, %v175
  %v220 = vpack.c.b16 %v180, %v176
  %v221 = vpack.c.b16 %v185, %v181
  %v222 = vpack.c.b16 %v186, %v182
  %v223 = vpack.c.b16 %v187, %v183
  %v224 = vpack.c.b16 %v188, %v184
  %v225 = vpack.c.b16 %v193, %v189
  %v226 = vpack.c.b16 %v194, %v190
  %v227 = vpack.c.b16 %v195, %v191
  %v228 = vpack.c.b16 %v196, %v192
  %261 = vmatpush.bf16.msra.mxu0 %v225
  %262 = vmatpush.bf16.msra.mxu0 %v221
  %263 = vmatpush.bf16.msra.mxu0 %v217
  %264 = vmatpush.bf16.msra.mxu0 %v213
  %265 = vmatpush.bf16.msra.mxu0 %v209
  %266 = vmatpush.bf16.msra.mxu0 %v205
  %267 = vmatpush.bf16.msra.mxu0 %v201
  %268 = vmatpush.bf16.msra.mxu0 %v197
  %269 = vmatmul.bf16.gmra.mxu0 %v93
  %v270 = vpop.f32.mrf.mxu0
  %v271 = vadd.f32 %v69, %v270
  %v272 = vpop.f32.mrf.mxu0
  %v273 = vadd.f32 %v69, %v272
  %274 = vmatmul.bf16.gmra.mxu0 %v94
  %v275 = vpop.f32.mrf.mxu0
  %v276 = vadd.f32 %v69, %v275
  %v277 = vpop.f32.mrf.mxu0
  %v278 = vadd.f32 %v69, %v277
  %279 = vmatmul.bf16.gmra.mxu0 %v95
  %v280 = vpop.f32.mrf.mxu0
  %v281 = vadd.f32 %v69, %v280
  %v282 = vpop.f32.mrf.mxu0
  %v283 = vadd.f32 %v69, %v282
  %284 = vmatmul.bf16.gmra.mxu0 %v96
  %v285 = vpop.f32.mrf.mxu0
  %v286 = vadd.f32 %v69, %v285
  %v287 = vpop.f32.mrf.mxu0
  %v288 = vadd.f32 %v69, %v287
  %289 = vdwg.mxu0
  %290 = vmatpush.bf16.msra.mxu0 %v226
  %291 = vmatpush.bf16.msra.mxu0 %v222
  %292 = vmatpush.bf16.msra.mxu0 %v218
  %293 = vmatpush.bf16.msra.mxu0 %v214
  %294 = vmatpush.bf16.msra.mxu0 %v210
  %295 = vmatpush.bf16.msra.mxu0 %v206
  %296 = vmatpush.bf16.msra.mxu0 %v202
  %297 = vmatpush.bf16.msra.mxu0 %v198
  %298 = vmatmul.bf16.gmra.mxu0 %v93
  %v299 = vpop.f32.mrf.mxu0
  %v300 = vadd.f32 %v70, %v299
  %v301 = vpop.f32.mrf.mxu0
  %v302 = vadd.f32 %v70, %v301
  %303 = vmatmul.bf16.gmra.mxu0 %v94
  %v304 = vpop.f32.mrf.mxu0
  %v305 = vadd.f32 %v70, %v304
  %v306 = vpop.f32.mrf.mxu0
  %v307 = vadd.f32 %v70, %v306
  %308 = vmatmul.bf16.gmra.mxu0 %v95
  %v309 = vpop.f32.mrf.mxu0
  %v310 = vadd.f32 %v70, %v309
  %v311 = vpop.f32.mrf.mxu0
  %v312 = vadd.f32 %v70, %v311
  %313 = vmatmul.bf16.gmra.mxu0 %v96
  %v314 = vpop.f32.mrf.mxu0
  %v315 = vadd.f32 %v70, %v314
  %v316 = vpop.f32.mrf.mxu0
  %v317 = vadd.f32 %v70, %v316
  %318 = vdwg.mxu0
  %319 = vmatpush.bf16.msra.mxu0 %v227
  %320 = vmatpush.bf16.msra.mxu0 %v223
  %321 = vmatpush.bf16.msra.mxu0 %v219
  %322 = vmatpush.bf16.msra.mxu0 %v215
  %323 = vmatpush.bf16.msra.mxu0 %v211
  %324 = vmatpush.bf16.msra.mxu0 %v207
  %325 = vmatpush.bf16.msra.mxu0 %v203
  %326 = vmatpush.bf16.msra.mxu0 %v199
  %327 = vmatmul.bf16.gmra.mxu0 %v93
  %v328 = vpop.f32.mrf.mxu0
  %v329 = vadd.f32 %v71, %v328
  %v330 = vpop.f32.mrf.mxu0
  %v331 = vadd.f32 %v71, %v330
  %332 = vmatmul.bf16.gmra.mxu0 %v94
  %v333 = vpop.f32.mrf.mxu0
  %v334 = vadd.f32 %v71, %v333
  %v335 = vpop.f32.mrf.mxu0
  %v336 = vadd.f32 %v71, %v335
  %337 = vmatmul.bf16.gmra.mxu0 %v95
  %v338 = vpop.f32.mrf.mxu0
  %v339 = vadd.f32 %v71, %v338
  %v340 = vpop.f32.mrf.mxu0
  %v341 = vadd.f32 %v71, %v340
  %342 = vmatmul.bf16.gmra.mxu0 %v96
  %v343 = vpop.f32.mrf.mxu0
  %v344 = vadd.f32 %v71, %v343
  %v345 = vpop.f32.mrf.mxu0
  %v346 = vadd.f32 %v71, %v345
  %347 = vdwg.mxu0
  %348 = vmatpush.bf16.msra.mxu0 %v228
  %349 = vmatpush.bf16.msra.mxu0 %v224
  %350 = vmatpush.bf16.msra.mxu0 %v220
  %351 = vmatpush.bf16.msra.mxu0 %v216
  %352 = vmatpush.bf16.msra.mxu0 %v212
  %353 = vmatpush.bf16.msra.mxu0 %v208
  %354 = vmatpush.bf16.msra.mxu0 %v204
  %355 = vmatpush.bf16.msra.mxu0 %v200
  %356 = vmatmul.bf16.gmra.mxu0 %v93
  %v357 = vpop.f32.mrf.mxu0
  %v358 = vadd.f32 %v72, %v357
  %v359 = vpop.f32.mrf.mxu0
  %v360 = vadd.f32 %v72, %v359
  %361 = vmatmul.bf16.gmra.mxu0 %v94
  %v362 = vpop.f32.mrf.mxu0
  %v363 = vadd.f32 %v72, %v362
  %v364 = vpop.f32.mrf.mxu0
  %v365 = vadd.f32 %v72, %v364
  %366 = vmatmul.bf16.gmra.mxu0 %v95
  %v367 = vpop.f32.mrf.mxu0
  %v368 = vadd.f32 %v72, %v367
  %v369 = vpop.f32.mrf.mxu0
  %v370 = vadd.f32 %v72, %v369
  %371 = vmatmul.bf16.gmra.mxu0 %v96
  %v372 = vpop.f32.mrf.mxu0
  %v373 = vadd.f32 %v72, %v372
  %v374 = vpop.f32.mrf.mxu0
  %v375 = vadd.f32 %v72, %v374
  %376 = vdwg.mxu0
  %377 = vst [vmem:[#allocation2] sm:$0xff] %v271
  %378 = vst [vmem:[#allocation2 + $0x8] sm:$0xff] %v300
  %379 = vst [vmem:[#allocation2 + $0x10] sm:$0xff] %v329
  %380 = vst [vmem:[#allocation2 + $0x18] sm:$0xff] %v358
  %381 = vst [vmem:[#allocation2 + $0x20] sm:$0xff] %v273
  %382 = vst [vmem:[#allocation2 + $0x28] sm:$0xff] %v302
  %383 = vst [vmem:[#allocation2 + $0x30] sm:$0xff] %v331
  %384 = vst [vmem:[#allocation2 + $0x38] sm:$0xff] %v360
  %385 = vst [vmem:[#allocation2 + $0x40] sm:$0xff] %v276
  %386 = vst [vmem:[#allocation2 + $0x48] sm:$0xff] %v305
  %387 = vst [vmem:[#allocation2 + $0x50] sm:$0xff] %v334
  %388 = vst [vmem:[#allocation2 + $0x58] sm:$0xff] %v363
  %389 = vst [vmem:[#allocation2 + $0x60] sm:$0xff] %v278
  %390 = vst [vmem:[#allocation2 + $0x68] sm:$0xff] %v307
  %391 = vst [vmem:[#allocation2 + $0x70] sm:$0xff] %v336
  %392 = vst [vmem:[#allocation2 + $0x78] sm:$0xff] %v365
  %393 = vst [vmem:[#allocation2 + $0x80] sm:$0xff] %v281
  %394 = vst [vmem:[#allocation2 + $0x88] sm:$0xff] %v310
  %395 = vst [vmem:[#allocation2 + $0x90] sm:$0xff] %v339
  %396 = vst [vmem:[#allocation2 + $0x98] sm:$0xff] %v368
  %397 = vst [vmem:[#allocation2 + $0xa0] sm:$0xff] %v283
  %398 = vst [vmem:[#allocation2 + $0xa8] sm:$0xff] %v312
  %399 = vst [vmem:[#allocation2 + $0xb0] sm:$0xff] %v341
  %400 = vst [vmem:[#allocation2 + $0xb8] sm:$0xff] %v370
  %401 = vst [vmem:[#allocation2 + $0xc0] sm:$0xff] %v286
  %402 = vst [vmem:[#allocation2 + $0xc8] sm:$0xff] %v315
  %403 = vst [vmem:[#allocation2 + $0xd0] sm:$0xff] %v344
  %404 = vst [vmem:[#allocation2 + $0xd8] sm:$0xff] %v373
  %405 = vst [vmem:[#allocation2 + $0xe0] sm:$0xff] %v288
  %406 = vst [vmem:[#allocation2 + $0xe8] sm:$0xff] %v317
  %407 = vst [vmem:[#allocation2 + $0xf0] sm:$0xff] %v346
  %408 = vst [vmem:[#allocation2 + $0xf8] sm:$0xff] %v375
  %v409 = vld [vmem:[%s2] sm:$0xff]
  %v410 = vld [vmem:[%s2 + $0x8] sm:$0xff]
  %v411 = vld [vmem:[%s2 + $0x10] sm:$0xff]
  %v412 = vld [vmem:[%s2 + $0x18] sm:$0xff]
  %v413 = vld [vmem:[%s2 + $0x20] sm:$0xff]
  %v414 = vld [vmem:[%s2 + $0x28] sm:$0xff]
  %v415 = vld [vmem:[%s2 + $0x30] sm:$0xff]
  %v416 = vld [vmem:[%s2 + $0x38] sm:$0xff]
  %v417 = vld [vmem:[%s2 + $0x40] sm:$0xff]
  %v418 = vld [vmem:[%s2 + $0x48] sm:$0xff]
  %v419 = vld [vmem:[%s2 + $0x50] sm:$0xff]
  %v420 = vld [vmem:[%s2 + $0x58] sm:$0xff]
  %v421 = vld [vmem:[%s2 + $0x60] sm:$0xff]
  %v422 = vld [vmem:[%s2 + $0x68] sm:$0xff]
  %v423 = vld [vmem:[%s2 + $0x70] sm:$0xff]
  %v424 = vld [vmem:[%s2 + $0x78] sm:$0xff]
  %v425 = vld [vmem:[%s2 + $0x80] sm:$0xff]
  %v426 = vld [vmem:[%s2 + $0x88] sm:$0xff]
  %v427 = vld [vmem:[%s2 + $0x90] sm:$0xff]
  %v428 = vld [vmem:[%s2 + $0x98] sm:$0xff]
  %v429 = vld [vmem:[%s2 + $0xa0] sm:$0xff]
  %v430 = vld [vmem:[%s2 + $0xa8] sm:$0xff]
  %v431 = vld [vmem:[%s2 + $0xb0] sm:$0xff]
  %v432 = vld [vmem:[%s2 + $0xb8] sm:$0xff]
  %v433 = vld [vmem:[%s2 + $0xc0] sm:$0xff]
  %v434 = vld [vmem:[%s2 + $0xc8] sm:$0xff]
  %v435 = vld [vmem:[%s2 + $0xd0] sm:$0xff]
  %v436 = vld [vmem:[%s2 + $0xd8] sm:$0xff]
  %v437 = vld [vmem:[%s2 + $0xe0] sm:$0xff]
  %v438 = vld [vmem:[%s2 + $0xe8] sm:$0xff]
  %v439 = vld [vmem:[%s2 + $0xf0] sm:$0xff]
  %v440 = vld [vmem:[%s2 + $0xf8] sm:$0xff]
  %v441 = vld [vmem:[#allocation2] sm:$0xff]
  %v442 = vld [vmem:[#allocation2 + $0x8] sm:$0xff]
  %v443 = vld [vmem:[#allocation2 + $0x10] sm:$0xff]
  %v444 = vld [vmem:[#allocation2 + $0x18] sm:$0xff]
  %v477 = vunpack.c.l.b16 %v409
  %v478 = vunpack.c.h.b16 %v409
  %v479 = vunpack.c.l.b16 %v410
  %v480 = vunpack.c.h.b16 %v410
  %v481 = vunpack.c.l.b16 %v411
  %v482 = vunpack.c.h.b16 %v411
  %v483 = vunpack.c.l.b16 %v412
  %v484 = vunpack.c.h.b16 %v412
  %v485 = vunpack.c.l.b16 %v413
  %v486 = vunpack.c.h.b16 %v413
  %v487 = vunpack.c.l.b16 %v414
  %v488 = vunpack.c.h.b16 %v414
  %v489 = vunpack.c.l.b16 %v415
  %v490 = vunpack.c.h.b16 %v415
  %v491 = vunpack.c.l.b16 %v416
  %v492 = vunpack.c.h.b16 %v416
  %v493 = vunpack.c.l.b16 %v417
  %v494 = vunpack.c.h.b16 %v417
  %v495 = vunpack.c.l.b16 %v418
  %v496 = vunpack.c.h.b16 %v418
  %v497 = vunpack.c.l.b16 %v419
  %v498 = vunpack.c.h.b16 %v419
  %v499 = vunpack.c.l.b16 %v420
  %v500 = vunpack.c.h.b16 %v420
  %v501 = vunpack.c.l.b16 %v421
  %v502 = vunpack.c.h.b16 %v421
  %v503 = vunpack.c.l.b16 %v422
  %v504 = vunpack.c.h.b16 %v422
  %v505 = vunpack.c.l.b16 %v423
  %v506 = vunpack.c.h.b16 %v423
  %v507 = vunpack.c.l.b16 %v424
  %v508 = vunpack.c.h.b16 %v424
  %v509 = vunpack.c.l.b16 %v425
  %v510 = vunpack.c.h.b16 %v425
  %v511 = vunpack.c.l.b16 %v426
  %v512 = vunpack.c.h.b16 %v426
  %v513 = vunpack.c.l.b16 %v427
  %v514 = vunpack.c.h.b16 %v427
  %v515 = vunpack.c.l.b16 %v428
  %v516 = vunpack.c.h.b16 %v428
  %v517 = vunpack.c.l.b16 %v429
  %v518 = vunpack.c.h.b16 %v429
  %v519 = vunpack.c.l.b16 %v430
  %v520 = vunpack.c.h.b16 %v430
  %v521 = vunpack.c.l.b16 %v431
  %v522 = vunpack.c.h.b16 %v431
  %v523 = vunpack.c.l.b16 %v432
  %v524 = vunpack.c.h.b16 %v432
  %v525 = vunpack.c.l.b16 %v433
  %v526 = vunpack.c.h.b16 %v433
  %v527 = vunpack.c.l.b16 %v434
  %v528 = vunpack.c.h.b16 %v434
  %v529 = vunpack.c.l.b16 %v435
  %v530 = vunpack.c.h.b16 %v435
  %v531 = vunpack.c.l.b16 %v436
  %v532 = vunpack.c.h.b16 %v436
  %v533 = vunpack.c.l.b16 %v437
  %v534 = vunpack.c.h.b16 %v437
  %v535 = vunpack.c.l.b16 %v438
  %v536 = vunpack.c.h.b16 %v438
  %v537 = vunpack.c.l.b16 %v439
  %v538 = vunpack.c.h.b16 %v439
  %v539 = vunpack.c.l.b16 %v440
  %v540 = vunpack.c.h.b16 %v440
  %v541 = vpack.c.b16 %v481, %v477
  %v542 = vpack.c.b16 %v482, %v478
  %v543 = vpack.c.b16 %v483, %v479
  %v544 = vpack.c.b16 %v484, %v480
  %v545 = vpack.c.b16 %v489, %v485
  %v546 = vpack.c.b16 %v490, %v486
  %v547 = vpack.c.b16 %v491, %v487
  %v548 = vpack.c.b16 %v492, %v488
  %v549 = vpack.c.b16 %v497, %v493
  %v550 = vpack.c.b16 %v498, %v494
  %v551 = vpack.c.b16 %v499, %v495
  %v552 = vpack.c.b16 %v500, %v496
  %v553 = vpack.c.b16 %v505, %v501
  %v554 = vpack.c.b16 %v506, %v502
  %v555 = vpack.c.b16 %v507, %v503
  %v556 = vpack.c.b16 %v508, %v504
  %v557 = vpack.c.b16 %v513, %v509
  %v558 = vpack.c.b16 %v514, %v510
  %v559 = vpack.c.b16 %v515, %v511
  %v560 = vpack.c.b16 %v516, %v512
  %v561 = vpack.c.b16 %v521, %v517
  %v562 = vpack.c.b16 %v522, %v518
  %v563 = vpack.c.b16 %v523, %v519
  %v564 = vpack.c.b16 %v524, %v520
  %v565 = vpack.c.b16 %v529, %v525
  %v566 = vpack.c.b16 %v530, %v526
  %v567 = vpack.c.b16 %v531, %v527
  %v568 = vpack.c.b16 %v532, %v528
  %v569 = vpack.c.b16 %v537, %v533
  %v570 = vpack.c.b16 %v538, %v534
  %v571 = vpack.c.b16 %v539, %v535
  %v572 = vpack.c.b16 %v540, %v536
  %605 = vmatpush.bf16.msra.mxu0 %v569
  %606 = vmatpush.bf16.msra.mxu0 %v565
  %607 = vmatpush.bf16.msra.mxu0 %v561
  %608 = vmatpush.bf16.msra.mxu0 %v557
  %609 = vmatpush.bf16.msra.mxu0 %v553
  %610 = vmatpush.bf16.msra.mxu0 %v549
  %611 = vmatpush.bf16.msra.mxu0 %v545
  %612 = vmatpush.bf16.msra.mxu0 %v541
  %613 = vmatmul.bf16.gmra.mxu0 0
  %v614 = vpop.f32.mrf.mxu0
  %v615 = vadd.f32 0.0, %v614
  %v616 = vpop.f32.mrf.mxu0
  %617 = vdwg.mxu0
  %618 = vmatpush.bf16.msra.mxu0 %v570
  %619 = vmatpush.bf16.msra.mxu0 %v566
  %620 = vmatpush.bf16.msra.mxu0 %v562
  %621 = vmatpush.bf16.msra.mxu0 %v558
  %622 = vmatpush.bf16.msra.mxu0 %v554
  %623 = vmatpush.bf16.msra.mxu0 %v550
  %624 = vmatpush.bf16.msra.mxu0 %v546
  %625 = vmatpush.bf16.msra.mxu0 %v542
  %626 = vmatmul.bf16.gmra.mxu0 0
  %v627 = vpop.f32.mrf.mxu0
  %v628 = vadd.f32 0.0, %v627
  %v629 = vpop.f32.mrf.mxu0
  %630 = vdwg.mxu0
  %631 = vmatpush.bf16.msra.mxu0 %v571
  %632 = vmatpush.bf16.msra.mxu0 %v567
  %633 = vmatpush.bf16.msra.mxu0 %v563
  %634 = vmatpush.bf16.msra.mxu0 %v559
  %635 = vmatpush.bf16.msra.mxu0 %v555
  %636 = vmatpush.bf16.msra.mxu0 %v551
  %637 = vmatpush.bf16.msra.mxu0 %v547
  %638 = vmatpush.bf16.msra.mxu0 %v543
  %639 = vmatmul.bf16.gmra.mxu0 0
  %v640 = vpop.f32.mrf.mxu0
  %v641 = vadd.f32 0.0, %v640
  %v642 = vpop.f32.mrf.mxu0
  %643 = vdwg.mxu0
  %644 = vmatpush.bf16.msra.mxu0 %v572
  %645 = vmatpush.bf16.msra.mxu0 %v568
  %646 = vmatpush.bf16.msra.mxu0 %v564
  %647 = vmatpush.bf16.msra.mxu0 %v560
  %648 = vmatpush.bf16.msra.mxu0 %v556
  %649 = vmatpush.bf16.msra.mxu0 %v552
  %650 = vmatpush.bf16.msra.mxu0 %v548
  %651 = vmatpush.bf16.msra.mxu0 %v544
  %652 = vmatmul.bf16.gmra.mxu0 0
  %v653 = vpop.f32.mrf.mxu0
  %v654 = vadd.f32 0.0, %v653
  %v655 = vpop.f32.mrf.mxu0
  %656 = vdwg.mxu0
  %v657 = vadd.f32 %v441, %v615
  %v658 = vadd.f32 %v442, %v628
  %v659 = vadd.f32 %v443, %v641
  %v660 = vadd.f32 %v444, %v654
  %v661 = vxor.u32 %v657, 2147483648
  %v662 = vmul.f32 %v661, 1.442695
  %v663 = vpow.pop %v662
  %v664 = vadd.f32 %v663, 1.0
  %v665 = vrcp.pop %v664
  %v666 = vmul.f32 %v664, %v665
  %v667 = vsub.f32 1.0, %v666
  %v668 = vmul.f32 %v665, %v667
  %v669 = vadd.f32 %v665, %v668
  %vm670 = vweird.f32 %v664
  %vm671 = vweird.f32 %v665
  %vm672 = vmor %vm670, %vm671
  %v673 = vsel %vm672, %v665, %v669
  %v674 = vand.u32 2147483647, %v664
  %vm675 = vcmp.eq.f32.partialorder %v674, 8.507059e+37
  %v676 = vand.u32 %v664, 2147483648
  %v677 = vor.u32 1.1754944e-38, %v676
  %v678 = vsel %vm675, %v677, %v673
  %v679 = vmul.f32 1.0, %v678
  %v680 = vxor.u32 %v658, 2147483648
  %v681 = vmul.f32 %v680, 1.442695
  %v682 = vpow.pop %v681
  %v683 = vadd.f32 %v682, 1.0
  %v684 = vrcp.pop %v683
  %v685 = vmul.f32 %v683, %v684
  %v686 = vsub.f32 1.0, %v685
  %v687 = vmul.f32 %v684, %v686
  %v688 = vadd.f32 %v684, %v687
  %vm689 = vweird.f32 %v683
  %vm690 = vweird.f32 %v684
  %vm691 = vmor %vm689, %vm690
  %v692 = vsel %vm691, %v684, %v688
  %v693 = vand.u32 2147483647, %v683
  %vm694 = vcmp.eq.f32.partialorder %v693, 8.507059e+37
  %v695 = vand.u32 %v683, 2147483648
  %v696 = vor.u32 1.1754944e-38, %v695
  %v697 = vsel %vm694, %v696, %v692
  %v698 = vmul.f32 1.0, %v697
  %v699 = vtanh.pop %v659
  %v700 = vxor.u32 %v660, 2147483648
  %v701 = vmul.f32 %v700, 1.442695
  %v702 = vpow.pop %v701
  %v703 = vadd.f32 %v702, 1.0
  %v704 = vrcp.pop %v703
  %v705 = vmul.f32 %v703, %v704
  %v706 = vsub.f32 1.0, %v705
  %v707 = vmul.f32 %v704, %v706
  %v708 = vadd.f32 %v704, %v707
  %vm709 = vweird.f32 %v703
  %vm710 = vweird.f32 %v704
  %vm711 = vmor %vm709, %vm710
  %v712 = vsel %vm711, %v704, %v708
  %v713 = vand.u32 2147483647, %v703
  %vm714 = vcmp.eq.f32.partialorder %v713, 8.507059e+37
  %v715 = vand.u32 %v703, 2147483648
  %v716 = vor.u32 1.1754944e-38, %v715
  %v717 = vsel %vm714, %v716, %v712
  %v718 = vmul.f32 1.0, %v717
  %v719 = vmul.f32 %v698, 0.0
  %v720 = vmul.f32 %v679, %v699
  %v721 = vadd.f32 %v719, %v720
  %v722 = vtanh.pop %v721
  %v723 = vmul.f32 %v718, %v722
  %s724 = scalar_lea.vmem [#allocation2], 32
  %v725 = vld [vmem:[%s724] sm:$0xff]
  %v726 = vld [vmem:[%s724 + $0x8] sm:$0xff]
  %v727 = vld [vmem:[%s724 + $0x10] sm:$0xff]
  %v728 = vld [vmem:[%s724 + $0x18] sm:$0xff]
  %v729 = vpack.c.bf16 %v723, %v723
  %730 = vmatpush.bf16.msra.mxu0 %v569
  %731 = vmatpush.bf16.msra.mxu0 %v565
  %732 = vmatpush.bf16.msra.mxu0 %v561
  %733 = vmatpush.bf16.msra.mxu0 %v557
  %734 = vmatpush.bf16.msra.mxu0 %v553
  %735 = vmatpush.bf16.msra.mxu0 %v549
  %736 = vmatpush.bf16.msra.mxu0 %v545
  %737 = vmatpush.bf16.msra.mxu0 %v541
  %738 = vmatmul.bf16.gmra.mxu0 %v729
  %v739 = vpop.f32.mrf.mxu0
  %v740 = vadd.f32 0.0, %v739
  %v741 = vpop.f32.mrf.mxu0
  %742 = vdwg.mxu0
  %743 = vmatpush.bf16.msra.mxu0 %v570
  %744 = vmatpush.bf16.msra.mxu0 %v566
  %745 = vmatpush.bf16.msra.mxu0 %v562
  %746 = vmatpush.bf16.msra.mxu0 %v558
  %747 = vmatpush.bf16.msra.mxu0 %v554
  %748 = vmatpush.bf16.msra.mxu0 %v550
  %749 = vmatpush.bf16.msra.mxu0 %v546
  %750 = vmatpush.bf16.msra.mxu0 %v542
  %751 = vmatmul.bf16.gmra.mxu0 %v729
  %v752 = vpop.f32.mrf.mxu0
  %v753 = vadd.f32 0.0, %v752
  %v754 = vpop.f32.mrf.mxu0
  %755 = vdwg.mxu0
  %756 = vmatpush.bf16.msra.mxu0 %v571
  %757 = vmatpush.bf16.msra.mxu0 %v567
  %758 = vmatpush.bf16.msra.mxu0 %v563
  %759 = vmatpush.bf16.msra.mxu0 %v559
  %760 = vmatpush.bf16.msra.mxu0 %v555
  %761 = vmatpush.bf16.msra.mxu0 %v551
  %762 = vmatpush.bf16.msra.mxu0 %v547
  %763 = vmatpush.bf16.msra.mxu0 %v543
  %764 = vmatmul.bf16.gmra.mxu0 %v729
  %v765 = vpop.f32.mrf.mxu0
  %v766 = vadd.f32 0.0, %v765
  %v767 = vpop.f32.mrf.mxu0
  %768 = vdwg.mxu0
  %769 = vmatpush.bf16.msra.mxu0 %v572
  %770 = vmatpush.bf16.msra.mxu0 %v568
  %771 = vmatpush.bf16.msra.mxu0 %v564
  %772 = vmatpush.bf16.msra.mxu0 %v560
  %773 = vmatpush.bf16.msra.mxu0 %v556
  %774 = vmatpush.bf16.msra.mxu0 %v552
  %775 = vmatpush.bf16.msra.mxu0 %v548
  %776 = vmatpush.bf16.msra.mxu0 %v544
  %777 = vmatmul.bf16.gmra.mxu0 %v729
  %v778 = vpop.f32.mrf.mxu0
  %v779 = vadd.f32 0.0, %v778
  %v780 = vpop.f32.mrf.mxu0
  %781 = vdwg.mxu0
  %v782 = vadd.f32 %v725, %v740
  %v783 = vadd.f32 %v726, %v753
  %v784 = vadd.f32 %v727, %v766
  %v785 = vadd.f32 %v728, %v779
  %v786 = vxor.u32 %v782, 2147483648
  %v787 = vmul.f32 %v786, 1.442695
  %v788 = vpow.pop %v787
  %v789 = vadd.f32 %v788, 1.0
  %v790 = vrcp.pop %v789
  %v791 = vmul.f32 %v789, %v790
  %v792 = vsub.f32 1.0, %v791
  %v793 = vmul.f32 %v790, %v792
  %v794 = vadd.f32 %v790, %v793
  %vm795 = vweird.f32 %v789
  %vm796 = vweird.f32 %v790
  %vm797 = vmor %vm795, %vm796
  %v798 = vsel %vm797, %v790, %v794
  %v799 = vand.u32 2147483647, %v789
  %vm800 = vcmp.eq.f32.partialorder %v799, 8.507059e+37
  %v801 = vand.u32 %v789, 2147483648
  %v802 = vor.u32 1.1754944e-38, %v801
  %v803 = vsel %vm800, %v802, %v798
  %v804 = vmul.f32 1.0, %v803
  %v805 = vxor.u32 %v783, 2147483648
  %v806 = vmul.f32 %v805, 1.442695
  %v807 = vpow.pop %v806
  %v808 = vadd.f32 %v807, 1.0
  %v809 = vrcp.pop %v808
  %v810 = vmul.f32 %v808, %v809
  %v811 = vsub.f32 1.0, %v810
  %v812 = vmul.f32 %v809, %v811
  %v813 = vadd.f32 %v809, %v812
  %vm814 = vweird.f32 %v808
  %vm815 = vweird.f32 %v809
  %vm816 = vmor %vm814, %vm815
  %v817 = vsel %vm816, %v809, %v813
  %v818 = vand.u32 2147483647, %v808
  %vm819 = vcmp.eq.f32.partialorder %v818, 8.507059e+37
  %v820 = vand.u32 %v808, 2147483648
  %v821 = vor.u32 1.1754944e-38, %v820
  %v822 = vsel %vm819, %v821, %v817
  %v823 = vmul.f32 1.0, %v822
  %v824 = vtanh.pop %v784
  %v825 = vxor.u32 %v785, 2147483648
  %v826 = vmul.f32 %v825, 1.442695
  %v827 = vpow.pop %v826
  %v828 = vadd.f32 %v827, 1.0
  %v829 = vrcp.pop %v828
  %v830 = vmul.f32 %v828, %v829
  %v831 = vsub.f32 1.0, %v830
  %v832 = vmul.f32 %v829, %v831
  %v833 = vadd.f32 %v829, %v832
  %vm834 = vweird.f32 %v828
  %vm835 = vweird.f32 %v829
  %vm836 = vmor %vm834, %vm835
  %v837 = vsel %vm836, %v829, %v833
  %v838 = vand.u32 2147483647, %v828
  %vm839 = vcmp.eq.f32.partialorder %v838, 8.507059e+37
  %v840 = vand.u32 %v828, 2147483648
  %v841 = vor.u32 1.1754944e-38, %v840
  %v842 = vsel %vm839, %v841, %v837
  %v843 = vmul.f32 1.0, %v842
  %v844 = vmul.f32 %v823, %v721
  %v845 = vmul.f32 %v804, %v824
  %v846 = vadd.f32 %v844, %v845
  %v847 = vtanh.pop %v846
  %v848 = vmul.f32 %v843, %v847
  %s849 = scalar_lea.vmem [#allocation2], 64
  %v850 = vld [vmem:[%s849] sm:$0xff]
  %v851 = vld [vmem:[%s849 + $0x8] sm:$0xff]
  %v852 = vld [vmem:[%s849 + $0x10] sm:$0xff]
  %v853 = vld [vmem:[%s849 + $0x18] sm:$0xff]
  %v854 = vpack.c.bf16 %v848, %v848
  %855 = vmatpush.bf16.msra.mxu0 %v569
  %856 = vmatpush.bf16.msra.mxu0 %v565
  %857 = vmatpush.bf16.msra.mxu0 %v561
  %858 = vmatpush.bf16.msra.mxu0 %v557
  %859 = vmatpush.bf16.msra.mxu0 %v553
  %860 = vmatpush.bf16.msra.mxu0 %v549
  %861 = vmatpush.bf16.msra.mxu0 %v545
  %862 = vmatpush.bf16.msra.mxu0 %v541
  %863 = vmatmul.bf16.gmra.mxu0 %v854
  %v864 = vpop.f32.mrf.mxu0
  %v865 = vadd.f32 0.0, %v864
  %v866 = vpop.f32.mrf.mxu0
  %867 = vdwg.mxu0
  %868 = vmatpush.bf16.msra.mxu0 %v570
  %869 = vmatpush.bf16.msra.mxu0 %v566
  %870 = vmatpush.bf16.msra.mxu0 %v562
  %871 = vmatpush.bf16.msra.mxu0 %v558
  %872 = vmatpush.bf16.msra.mxu0 %v554
  %873 = vmatpush.bf16.msra.mxu0 %v550
  %874 = vmatpush.bf16.msra.mxu0 %v546
  %875 = vmatpush.bf16.msra.mxu0 %v542
  %876 = vmatmul.bf16.gmra.mxu0 %v854
  %v877 = vpop.f32.mrf.mxu0
  %v878 = vadd.f32 0.0, %v877
  %v879 = vpop.f32.mrf.mxu0
  %880 = vdwg.mxu0
  %881 = vmatpush.bf16.msra.mxu0 %v571
  %882 = vmatpush.bf16.msra.mxu0 %v567
  %883 = vmatpush.bf16.msra.mxu0 %v563
  %884 = vmatpush.bf16.msra.mxu0 %v559
  %885 = vmatpush.bf16.msra.mxu0 %v555
  %886 = vmatpush.bf16.msra.mxu0 %v551
  %887 = vmatpush.bf16.msra.mxu0 %v547
  %888 = vmatpush.bf16.msra.mxu0 %v543
  %889 = vmatmul.bf16.gmra.mxu0 %v854
  %v890 = vpop.f32.mrf.mxu0
  %v891 = vadd.f32 0.0, %v890
  %v892 = vpop.f32.mrf.mxu0
  %893 = vdwg.mxu0
  %894 = vmatpush.bf16.msra.mxu0 %v572
  %895 = vmatpush.bf16.msra.mxu0 %v568
  %896 = vmatpush.bf16.msra.mxu0 %v564
  %897 = vmatpush.bf16.msra.mxu0 %v560
  %898 = vmatpush.bf16.msra.mxu0 %v556
  %899 = vmatpush.bf16.msra.mxu0 %v552
  %900 = vmatpush.bf16.msra.mxu0 %v548
  %901 = vmatpush.bf16.msra.mxu0 %v544
  %902 = vmatmul.bf16.gmra.mxu0 %v854
  %v903 = vpop.f32.mrf.mxu0
  %v904 = vadd.f32 0.0, %v903
  %v905 = vpop.f32.mrf.mxu0
  %906 = vdwg.mxu0
  %v907 = vadd.f32 %v850, %v865
  %v908 = vadd.f32 %v851, %v878
  %v909 = vadd.f32 %v852, %v891
  %v910 = vadd.f32 %v853, %v904
  %v911 = vxor.u32 %v907, 2147483648
  %v912 = vmul.f32 %v911, 1.442695
  %v913 = vpow.pop %v912
  %v914 = vadd.f32 %v913, 1.0
  %v915 = vrcp.pop %v914
  %v916 = vmul.f32 %v914, %v915
  %v917 = vsub.f32 1.0, %v916
  %v918 = vmul.f32 %v915, %v917
  %v919 = vadd.f32 %v915, %v918
  %vm920 = vweird.f32 %v914
  %vm921 = vweird.f32 %v915
  %vm922 = vmor %vm920, %vm921
  %v923 = vsel %vm922, %v915, %v919
  %v924 = vand.u32 2147483647, %v914
  %vm925 = vcmp.eq.f32.partialorder %v924, 8.507059e+37
  %v926 = vand.u32 %v914, 2147483648
  %v927 = vor.u32 1.1754944e-38, %v926
  %v928 = vsel %vm925, %v927, %v923
  %v929 = vmul.f32 1.0, %v928
  %v930 = vxor.u32 %v908, 2147483648
  %v931 = vmul.f32 %v930, 1.442695
  %v932 = vpow.pop %v931
  %v933 = vadd.f32 %v932, 1.0
  %v934 = vrcp.pop %v933
  %v935 = vmul.f32 %v933, %v934
  %v936 = vsub.f32 1.0, %v935
  %v937 = vmul.f32 %v934, %v936
  %v938 = vadd.f32 %v934, %v937
  %vm939 = vweird.f32 %v933
  %vm940 = vweird.f32 %v934
  %vm941 = vmor %vm939, %vm940
  %v942 = vsel %vm941, %v934, %v938
  %v943 = vand.u32 2147483647, %v933
  %vm944 = vcmp.eq.f32.partialorder %v943, 8.507059e+37
  %v945 = vand.u32 %v933, 2147483648
  %v946 = vor.u32 1.1754944e-38, %v945
  %v947 = vsel %vm944, %v946, %v942
  %v948 = vmul.f32 1.0, %v947
  %v949 = vtanh.pop %v909
  %v950 = vxor.u32 %v910, 2147483648
  %v951 = vmul.f32 %v950, 1.442695
  %v952 = vpow.pop %v951
  %v953 = vadd.f32 %v952, 1.0
  %v954 = vrcp.pop %v953
  %v955 = vmul.f32 %v953, %v954
  %v956 = vsub.f32 1.0, %v955
  %v957 = vmul.f32 %v954, %v956
  %v958 = vadd.f32 %v954, %v957
  %vm959 = vweird.f32 %v953
  %vm960 = vweird.f32 %v954
  %vm961 = vmor %vm959, %vm960
  %v962 = vsel %vm961, %v954, %v958
  %v963 = vand.u32 2147483647, %v953
  %vm964 = vcmp.eq.f32.partialorder %v963, 8.507059e+37
  %v965 = vand.u32 %v953, 2147483648
  %v966 = vor.u32 1.1754944e-38, %v965
  %v967 = vsel %vm964, %v966, %v962
  %v968 = vmul.f32 1.0, %v967
  %v969 = vmul.f32 %v948, %v846
  %v970 = vmul.f32 %v929, %v949
  %v971 = vadd.f32 %v969, %v970
  %v972 = vtanh.pop %v971
  %v973 = vmul.f32 %v968, %v972
  %s974 = scalar_lea.vmem [#allocation2], 96
  %v975 = vld [vmem:[%s974] sm:$0xff]
  %v976 = vld [vmem:[%s974 + $0x8] sm:$0xff]
  %v977 = vld [vmem:[%s974 + $0x10] sm:$0xff]
  %v978 = vld [vmem:[%s974 + $0x18] sm:$0xff]
  %v979 = vpack.c.bf16 %v973, %v973
  %980 = vmatpush.bf16.msra.mxu0 %v569
  %981 = vmatpush.bf16.msra.mxu0 %v565
  %982 = vmatpush.bf16.msra.mxu0 %v561
  %983 = vmatpush.bf16.msra.mxu0 %v557
  %984 = vmatpush.bf16.msra.mxu0 %v553
  %985 = vmatpush.bf16.msra.mxu0 %v549
  %986 = vmatpush.bf16.msra.mxu0 %v545
  %987 = vmatpush.bf16.msra.mxu0 %v541
  %988 = vmatmul.bf16.gmra.mxu0 %v979
  %v989 = vpop.f32.mrf.mxu0
  %v990 = vadd.f32 0.0, %v989
  %v991 = vpop.f32.mrf.mxu0
  %992 = vdwg.mxu0
  %993 = vmatpush.bf16.msra.mxu0 %v570
  %994 = vmatpush.bf16.msra.mxu0 %v566
  %995 = vmatpush.bf16.msra.mxu0 %v562
  %996 = vmatpush.bf16.msra.mxu0 %v558
  %997 = vmatpush.bf16.msra.mxu0 %v554
  %998 = vmatpush.bf16.msra.mxu0 %v550
  %999 = vmatpush.bf16.msra.mxu0 %v546
  %1000 = vmatpush.bf16.msra.mxu0 %v542
  %1001 = vmatmul.bf16.gmra.mxu0 %v979
  %v1002 = vpop.f32.mrf.mxu0
  %v1003 = vadd.f32 0.0, %v1002
  %v1004 = vpop.f32.mrf.mxu0
  %1005 = vdwg.mxu0
  %1006 = vmatpush.bf16.msra.mxu0 %v571
  %1007 = vmatpush.bf16.msra.mxu0 %v567
  %1008 = vmatpush.bf16.msra.mxu0 %v563
  %1009 = vmatpush.bf16.msra.mxu0 %v559
  %1010 = vmatpush.bf16.msra.mxu0 %v555
  %1011 = vmatpush.bf16.msra.mxu0 %v551
  %1012 = vmatpush.bf16.msra.mxu0 %v547
  %1013 = vmatpush.bf16.msra.mxu0 %v543
  %1014 = vmatmul.bf16.gmra.mxu0 %v979
  %v1015 = vpop.f32.mrf.mxu0
  %v1016 = vadd.f32 0.0, %v1015
  %v1017 = vpop.f32.mrf.mxu0
  %1018 = vdwg.mxu0
  %1019 = vmatpush.bf16.msra.mxu0 %v572
  %1020 = vmatpush.bf16.msra.mxu0 %v568
  %1021 = vmatpush.bf16.msra.mxu0 %v564
  %1022 = vmatpush.bf16.msra.mxu0 %v560
  %1023 = vmatpush.bf16.msra.mxu0 %v556
  %1024 = vmatpush.bf16.msra.mxu0 %v552
  %1025 = vmatpush.bf16.msra.mxu0 %v548
  %1026 = vmatpush.bf16.msra.mxu0 %v544
  %1027 = vmatmul.bf16.gmra.mxu0 %v979
  %v1028 = vpop.f32.mrf.mxu0
  %v1029 = vadd.f32 0.0, %v1028
  %v1030 = vpop.f32.mrf.mxu0
  %1031 = vdwg.mxu0
  %v1032 = vadd.f32 %v975, %v990
  %v1033 = vadd.f32 %v976, %v1003
  %v1034 = vadd.f32 %v977, %v1016
  %v1035 = vadd.f32 %v978, %v1029
  %v1036 = vxor.u32 %v1032, 2147483648
  %v1037 = vmul.f32 %v1036, 1.442695
  %v1038 = vpow.pop %v1037
  %v1039 = vadd.f32 %v1038, 1.0
  %v1040 = vrcp.pop %v1039
  %v1041 = vmul.f32 %v1039, %v1040
  %v1042 = vsub.f32 1.0, %v1041
  %v1043 = vmul.f32 %v1040, %v1042
  %v1044 = vadd.f32 %v1040, %v1043
  %vm1045 = vweird.f32 %v1039
  %vm1046 = vweird.f32 %v1040
  %vm1047 = vmor %vm1045, %vm1046
  %v1048 = vsel %vm1047, %v1040, %v1044
  %v1049 = vand.u32 2147483647, %v1039
  %vm1050 = vcmp.eq.f32.partialorder %v1049, 8.507059e+37
  %v1051 = vand.u32 %v1039, 2147483648
  %v1052 = vor.u32 1.1754944e-38, %v1051
  %v1053 = vsel %vm1050, %v1052, %v1048
  %v1054 = vmul.f32 1.0, %v1053
  %v1055 = vxor.u32 %v1033, 2147483648
  %v1056 = vmul.f32 %v1055, 1.442695
  %v1057 = vpow.pop %v1056
  %v1058 = vadd.f32 %v1057, 1.0
  %v1059 = vrcp.pop %v1058
  %v1060 = vmul.f32 %v1058, %v1059
  %v1061 = vsub.f32 1.0, %v1060
  %v1062 = vmul.f32 %v1059, %v1061
  %v1063 = vadd.f32 %v1059, %v1062
  %vm1064 = vweird.f32 %v1058
  %vm1065 = vweird.f32 %v1059
  %vm1066 = vmor %vm1064, %vm1065
  %v1067 = vsel %vm1066, %v1059, %v1063
  %v1068 = vand.u32 2147483647, %v1058
  %vm1069 = vcmp.eq.f32.partialorder %v1068, 8.507059e+37
  %v1070 = vand.u32 %v1058, 2147483648
  %v1071 = vor.u32 1.1754944e-38, %v1070
  %v1072 = vsel %vm1069, %v1071, %v1067
  %v1073 = vmul.f32 1.0, %v1072
  %v1074 = vtanh.pop %v1034
  %v1075 = vxor.u32 %v1035, 2147483648
  %v1076 = vmul.f32 %v1075, 1.442695
  %v1077 = vpow.pop %v1076
  %v1078 = vadd.f32 %v1077, 1.0
  %v1079 = vrcp.pop %v1078
  %v1080 = vmul.f32 %v1078, %v1079
  %v1081 = vsub.f32 1.0, %v1080
  %v1082 = vmul.f32 %v1079, %v1081
  %v1083 = vadd.f32 %v1079, %v1082
  %vm1084 = vweird.f32 %v1078
  %vm1085 = vweird.f32 %v1079
  %vm1086 = vmor %vm1084, %vm1085
  %v1087 = vsel %vm1086, %v1079, %v1083
  %v1088 = vand.u32 2147483647, %v1078
  %vm1089 = vcmp.eq.f32.partialorder %v1088, 8.507059e+37
  %v1090 = vand.u32 %v1078, 2147483648
  %v1091 = vor.u32 1.1754944e-38, %v1090
  %v1092 = vsel %vm1089, %v1091, %v1087
  %v1093 = vmul.f32 1.0, %v1092
  %v1094 = vmul.f32 %v1073, %v971
  %v1095 = vmul.f32 %v1054, %v1074
  %v1096 = vadd.f32 %v1094, %v1095
  %v1097 = vtanh.pop %v1096
  %v1098 = vmul.f32 %v1093, %v1097
  %s1099 = scalar_lea.vmem [#allocation2], 128
  %v1100 = vld [vmem:[%s1099] sm:$0xff]
  %v1101 = vld [vmem:[%s1099 + $0x8] sm:$0xff]
  %v1102 = vld [vmem:[%s1099 + $0x10] sm:$0xff]
  %v1103 = vld [vmem:[%s1099 + $0x18] sm:$0xff]
  %v1104 = vpack.c.bf16 %v1098, %v1098
  %1105 = vmatpush.bf16.msra.mxu0 %v569
  %1106 = vmatpush.bf16.msra.mxu0 %v565
  %1107 = vmatpush.bf16.msra.mxu0 %v561
  %1108 = vmatpush.bf16.msra.mxu0 %v557
  %1109 = vmatpush.bf16.msra.mxu0 %v553
  %1110 = vmatpush.bf16.msra.mxu0 %v549
  %1111 = vmatpush.bf16.msra.mxu0 %v545
  %1112 = vmatpush.bf16.msra.mxu0 %v541
  %1113 = vmatmul.bf16.gmra.mxu0 %v1104
  %v1114 = vpop.f32.mrf.mxu0
  %v1115 = vadd.f32 0.0, %v1114
  %v1116 = vpop.f32.mrf.mxu0
  %1117 = vdwg.mxu0
  %1118 = vmatpush.bf16.msra.mxu0 %v570
  %1119 = vmatpush.bf16.msra.mxu0 %v566
  %1120 = vmatpush.bf16.msra.mxu0 %v562
  %1121 = vmatpush.bf16.msra.mxu0 %v558
  %1122 = vmatpush.bf16.msra.mxu0 %v554
  %1123 = vmatpush.bf16.msra.mxu0 %v550
  %1124 = vmatpush.bf16.msra.mxu0 %v546
  %1125 = vmatpush.bf16.msra.mxu0 %v542
  %1126 = vmatmul.bf16.gmra.mxu0 %v1104
  %v1127 = vpop.f32.mrf.mxu0
  %v1128 = vadd.f32 0.0, %v1127
  %v1129 = vpop.f32.mrf.mxu0
  %1130 = vdwg.mxu0
  %1131 = vmatpush.bf16.msra.mxu0 %v571
  %1132 = vmatpush.bf16.msra.mxu0 %v567
  %1133 = vmatpush.bf16.msra.mxu0 %v563
  %1134 = vmatpush.bf16.msra.mxu0 %v559
  %1135 = vmatpush.bf16.msra.mxu0 %v555
  %1136 = vmatpush.bf16.msra.mxu0 %v551
  %1137 = vmatpush.bf16.msra.mxu0 %v547
  %1138 = vmatpush.bf16.msra.mxu0 %v543
  %1139 = vmatmul.bf16.gmra.mxu0 %v1104
  %v1140 = vpop.f32.mrf.mxu0
  %v1141 = vadd.f32 0.0, %v1140
  %v1142 = vpop.f32.mrf.mxu0
  %1143 = vdwg.mxu0
  %1144 = vmatpush.bf16.msra.mxu0 %v572
  %1145 = vmatpush.bf16.msra.mxu0 %v568
  %1146 = vmatpush.bf16.msra.mxu0 %v564
  %1147 = vmatpush.bf16.msra.mxu0 %v560
  %1148 = vmatpush.bf16.msra.mxu0 %v556
  %1149 = vmatpush.bf16.msra.mxu0 %v552
  %1150 = vmatpush.bf16.msra.mxu0 %v548
  %1151 = vmatpush.bf16.msra.mxu0 %v544
  %1152 = vmatmul.bf16.gmra.mxu0 %v1104
  %v1153 = vpop.f32.mrf.mxu0
  %v1154 = vadd.f32 0.0, %v1153
  %v1155 = vpop.f32.mrf.mxu0
  %1156 = vdwg.mxu0
  %v1157 = vadd.f32 %v1100, %v1115
  %v1158 = vadd.f32 %v1101, %v1128
  %v1159 = vadd.f32 %v1102, %v1141
  %v1160 = vadd.f32 %v1103, %v1154
  %v1161 = vxor.u32 %v1157, 2147483648
  %v1162 = vmul.f32 %v1161, 1.442695
  %v1163 = vpow.pop %v1162
  %v1164 = vadd.f32 %v1163, 1.0
  %v1165 = vrcp.pop %v1164
  %v1166 = vmul.f32 %v1164, %v1165
  %v1167 = vsub.f32 1.0, %v1166
  %v1168 = vmul.f32 %v1165, %v1167
  %v1169 = vadd.f32 %v1165, %v1168
  %vm1170 = vweird.f32 %v1164
  %vm1171 = vweird.f32 %v1165
  %vm1172 = vmor %vm1170, %vm1171
  %v1173 = vsel %vm1172, %v1165, %v1169
  %v1174 = vand.u32 2147483647, %v1164
  %vm1175 = vcmp.eq.f32.partialorder %v1174, 8.507059e+37
  %v1176 = vand.u32 %v1164, 2147483648
  %v1177 = vor.u32 1.1754944e-38, %v1176
  %v1178 = vsel %vm1175, %v1177, %v1173
  %v1179 = vmul.f32 1.0, %v1178
  %v1180 = vxor.u32 %v1158, 2147483648
  %v1181 = vmul.f32 %v1180, 1.442695
  %v1182 = vpow.pop %v1181
  %v1183 = vadd.f32 %v1182, 1.0
  %v1184 = vrcp.pop %v1183
  %v1185 = vmul.f32 %v1183, %v1184
  %v1186 = vsub.f32 1.0, %v1185
  %v1187 = vmul.f32 %v1184, %v1186
  %v1188 = vadd.f32 %v1184, %v1187
  %vm1189 = vweird.f32 %v1183
  %vm1190 = vweird.f32 %v1184
  %vm1191 = vmor %vm1189, %vm1190
  %v1192 = vsel %vm1191, %v1184, %v1188
  %v1193 = vand.u32 2147483647, %v1183
  %vm1194 = vcmp.eq.f32.partialorder %v1193, 8.507059e+37
  %v1195 = vand.u32 %v1183, 2147483648
  %v1196 = vor.u32 1.1754944e-38, %v1195
  %v1197 = vsel %vm1194, %v1196, %v1192
  %v1198 = vmul.f32 1.0, %v1197
  %v1199 = vtanh.pop %v1159
  %v1200 = vxor.u32 %v1160, 2147483648
  %v1201 = vmul.f32 %v1200, 1.442695
  %v1202 = vpow.pop %v1201
  %v1203 = vadd.f32 %v1202, 1.0
  %v1204 = vrcp.pop %v1203
  %v1205 = vmul.f32 %v1203, %v1204
  %v1206 = vsub.f32 1.0, %v1205
  %v1207 = vmul.f32 %v1204, %v1206
  %v1208 = vadd.f32 %v1204, %v1207
  %vm1209 = vweird.f32 %v1203
  %vm1210 = vweird.f32 %v1204
  %vm1211 = vmor %vm1209, %vm1210
  %v1212 = vsel %vm1211, %v1204, %v1208
  %v1213 = vand.u32 2147483647, %v1203
  %vm1214 = vcmp.eq.f32.partialorder %v1213, 8.507059e+37
  %v1215 = vand.u32 %v1203, 2147483648
  %v1216 = vor.u32 1.1754944e-38, %v1215
  %v1217 = vsel %vm1214, %v1216, %v1212
  %v1218 = vmul.f32 1.0, %v1217
  %v1219 = vmul.f32 %v1198, %v1096
  %v1220 = vmul.f32 %v1179, %v1199
  %v1221 = vadd.f32 %v1219, %v1220
  %v1222 = vtanh.pop %v1221
  %v1223 = vmul.f32 %v1218, %v1222
  %s1224 = scalar_lea.vmem [#allocation2], 160
  %v1225 = vld [vmem:[%s1224] sm:$0xff]
  %v1226 = vld [vmem:[%s1224 + $0x8] sm:$0xff]
  %v1227 = vld [vmem:[%s1224 + $0x10] sm:$0xff]
  %v1228 = vld [vmem:[%s1224 + $0x18] sm:$0xff]
  %v1229 = vpack.c.bf16 %v1223, %v1223
  %1230 = vmatpush.bf16.msra.mxu0 %v569
  %1231 = vmatpush.bf16.msra.mxu0 %v565
  %1232 = vmatpush.bf16.msra.mxu0 %v561
  %1233 = vmatpush.bf16.msra.mxu0 %v557
  %1234 = vmatpush.bf16.msra.mxu0 %v553
  %1235 = vmatpush.bf16.msra.mxu0 %v549
  %1236 = vmatpush.bf16.msra.mxu0 %v545
  %1237 = vmatpush.bf16.msra.mxu0 %v541
  %1238 = vmatmul.bf16.gmra.mxu0 %v1229
  %v1239 = vpop.f32.mrf.mxu0
  %v1240 = vadd.f32 0.0, %v1239
  %v1241 = vpop.f32.mrf.mxu0
  %1242 = vdwg.mxu0
  %1243 = vmatpush.bf16.msra.mxu0 %v570
  %1244 = vmatpush.bf16.msra.mxu0 %v566
  %1245 = vmatpush.bf16.msra.mxu0 %v562
  %1246 = vmatpush.bf16.msra.mxu0 %v558
  %1247 = vmatpush.bf16.msra.mxu0 %v554
  %1248 = vmatpush.bf16.msra.mxu0 %v550
  %1249 = vmatpush.bf16.msra.mxu0 %v546
  %1250 = vmatpush.bf16.msra.mxu0 %v542
  %1251 = vmatmul.bf16.gmra.mxu0 %v1229
  %v1252 = vpop.f32.mrf.mxu0
  %v1253 = vadd.f32 0.0, %v1252
  %v1254 = vpop.f32.mrf.mxu0
  %1255 = vdwg.mxu0
  %1256 = vmatpush.bf16.msra.mxu0 %v571
  %1257 = vmatpush.bf16.msra.mxu0 %v567
  %1258 = vmatpush.bf16.msra.mxu0 %v563
  %1259 = vmatpush.bf16.msra.mxu0 %v559
  %1260 = vmatpush.bf16.msra.mxu0 %v555
  %1261 = vmatpush.bf16.msra.mxu0 %v551
  %1262 = vmatpush.bf16.msra.mxu0 %v547
  %1263 = vmatpush.bf16.msra.mxu0 %v543
  %1264 = vmatmul.bf16.gmra.mxu0 %v1229
  %v1265 = vpop.f32.mrf.mxu0
  %v1266 = vadd.f32 0.0, %v1265
  %v1267 = vpop.f32.mrf.mxu0
  %1268 = vdwg.mxu0
  %1269 = vmatpush.bf16.msra.mxu0 %v572
  %1270 = vmatpush.bf16.msra.mxu0 %v568
  %1271 = vmatpush.bf16.msra.mxu0 %v564
  %1272 = vmatpush.bf16.msra.mxu0 %v560
  %1273 = vmatpush.bf16.msra.mxu0 %v556
  %1274 = vmatpush.bf16.msra.mxu0 %v552
  %1275 = vmatpush.bf16.msra.mxu0 %v548
  %1276 = vmatpush.bf16.msra.mxu0 %v544
  %1277 = vmatmul.bf16.gmra.mxu0 %v1229
  %v1278 = vpop.f32.mrf.mxu0
  %v1279 = vadd.f32 0.0, %v1278
  %v1280 = vpop.f32.mrf.mxu0
  %1281 = vdwg.mxu0
  %v1282 = vadd.f32 %v1225, %v1240
  %v1283 = vadd.f32 %v1226, %v1253
  %v1284 = vadd.f32 %v1227, %v1266
  %v1285 = vadd.f32 %v1228, %v1279
  %v1286 = vxor.u32 %v1282, 2147483648
  %v1287 = vmul.f32 %v1286, 1.442695
  %v1288 = vpow.pop %v1287
  %v1289 = vadd.f32 %v1288, 1.0
  %v1290 = vrcp.pop %v1289
  %v1291 = vmul.f32 %v1289, %v1290
  %v1292 = vsub.f32 1.0, %v1291
  %v1293 = vmul.f32 %v1290, %v1292
  %v1294 = vadd.f32 %v1290, %v1293
  %vm1295 = vweird.f32 %v1289
  %vm1296 = vweird.f32 %v1290
  %vm1297 = vmor %vm1295, %vm1296
  %v1298 = vsel %vm1297, %v1290, %v1294
  %v1299 = vand.u32 2147483647, %v1289
  %vm1300 = vcmp.eq.f32.partialorder %v1299, 8.507059e+37
  %v1301 = vand.u32 %v1289, 2147483648
  %v1302 = vor.u32 1.1754944e-38, %v1301
  %v1303 = vsel %vm1300, %v1302, %v1298
  %v1304 = vmul.f32 1.0, %v1303
  %v1305 = vxor.u32 %v1283, 2147483648
  %v1306 = vmul.f32 %v1305, 1.442695
  %v1307 = vpow.pop %v1306
  %v1308 = vadd.f32 %v1307, 1.0
  %v1309 = vrcp.pop %v1308
  %v1310 = vmul.f32 %v1308, %v1309
  %v1311 = vsub.f32 1.0, %v1310
  %v1312 = vmul.f32 %v1309, %v1311
  %v1313 = vadd.f32 %v1309, %v1312
  %vm1314 = vweird.f32 %v1308
  %vm1315 = vweird.f32 %v1309
  %vm1316 = vmor %vm1314, %vm1315
  %v1317 = vsel %vm1316, %v1309, %v1313
  %v1318 = vand.u32 2147483647, %v1308
  %vm1319 = vcmp.eq.f32.partialorder %v1318, 8.507059e+37
  %v1320 = vand.u32 %v1308, 2147483648
  %v1321 = vor.u32 1.1754944e-38, %v1320
  %v1322 = vsel %vm1319, %v1321, %v1317
  %v1323 = vmul.f32 1.0, %v1322
  %v1324 = vtanh.pop %v1284
  %v1325 = vxor.u32 %v1285, 2147483648
  %v1326 = vmul.f32 %v1325, 1.442695
  %v1327 = vpow.pop %v1326
  %v1328 = vadd.f32 %v1327, 1.0
  %v1329 = vrcp.pop %v1328
  %v1330 = vmul.f32 %v1328, %v1329
  %v1331 = vsub.f32 1.0, %v1330
  %v1332 = vmul.f32 %v1329, %v1331
  %v1333 = vadd.f32 %v1329, %v1332
  %vm1334 = vweird.f32 %v1328
  %vm1335 = vweird.f32 %v1329
  %vm1336 = vmor %vm1334, %vm1335
  %v1337 = vsel %vm1336, %v1329, %v1333
  %v1338 = vand.u32 2147483647, %v1328
  %vm1339 = vcmp.eq.f32.partialorder %v1338, 8.507059e+37
  %v1340 = vand.u32 %v1328, 2147483648
  %v1341 = vor.u32 1.1754944e-38, %v1340
  %v1342 = vsel %vm1339, %v1341, %v1337
  %v1343 = vmul.f32 1.0, %v1342
  %v1344 = vmul.f32 %v1323, %v1221
  %v1345 = vmul.f32 %v1304, %v1324
  %v1346 = vadd.f32 %v1344, %v1345
  %v1347 = vtanh.pop %v1346
  %v1348 = vmul.f32 %v1343, %v1347
  %s1349 = scalar_lea.vmem [#allocation2], 192
  %v1350 = vld [vmem:[%s1349] sm:$0xff]
  %v1351 = vld [vmem:[%s1349 + $0x8] sm:$0xff]
  %v1352 = vld [vmem:[%s1349 + $0x10] sm:$0xff]
  %v1353 = vld [vmem:[%s1349 + $0x18] sm:$0xff]
  %v1354 = vpack.c.bf16 %v1348, %v1348
  %1355 = vmatpush.bf16.msra.mxu0 %v569
  %1356 = vmatpush.bf16.msra.mxu0 %v565
  %1357 = vmatpush.bf16.msra.mxu0 %v561
  %1358 = vmatpush.bf16.msra.mxu0 %v557
  %1359 = vmatpush.bf16.msra.mxu0 %v553
  %1360 = vmatpush.bf16.msra.mxu0 %v549
  %1361 = vmatpush.bf16.msra.mxu0 %v545
  %1362 = vmatpush.bf16.msra.mxu0 %v541
  %1363 = vmatmul.bf16.gmra.mxu0 %v1354
  %v1364 = vpop.f32.mrf.mxu0
  %v1365 = vadd.f32 0.0, %v1364
  %v1366 = vpop.f32.mrf.mxu0
  %1367 = vdwg.mxu0
  %1368 = vmatpush.bf16.msra.mxu0 %v570
  %1369 = vmatpush.bf16.msra.mxu0 %v566
  %1370 = vmatpush.bf16.msra.mxu0 %v562
  %1371 = vmatpush.bf16.msra.mxu0 %v558
  %1372 = vmatpush.bf16.msra.mxu0 %v554
  %1373 = vmatpush.bf16.msra.mxu0 %v550
  %1374 = vmatpush.bf16.msra.mxu0 %v546
  %1375 = vmatpush.bf16.msra.mxu0 %v542
  %1376 = vmatmul.bf16.gmra.mxu0 %v1354
  %v1377 = vpop.f32.mrf.mxu0
  %v1378 = vadd.f32 0.0, %v1377
  %v1379 = vpop.f32.mrf.mxu0
  %1380 = vdwg.mxu0
  %1381 = vmatpush.bf16.msra.mxu0 %v571
  %1382 = vmatpush.bf16.msra.mxu0 %v567
  %1383 = vmatpush.bf16.msra.mxu0 %v563
  %1384 = vmatpush.bf16.msra.mxu0 %v559
  %1385 = vmatpush.bf16.msra.mxu0 %v555
  %1386 = vmatpush.bf16.msra.mxu0 %v551
  %1387 = vmatpush.bf16.msra.mxu0 %v547
  %1388 = vmatpush.bf16.msra.mxu0 %v543
  %1389 = vmatmul.bf16.gmra.mxu0 %v1354
  %v1390 = vpop.f32.mrf.mxu0
  %v1391 = vadd.f32 0.0, %v1390
  %v1392 = vpop.f32.mrf.mxu0
  %1393 = vdwg.mxu0
  %1394 = vmatpush.bf16.msra.mxu0 %v572
  %1395 = vmatpush.bf16.msra.mxu0 %v568
  %1396 = vmatpush.bf16.msra.mxu0 %v564
  %1397 = vmatpush.bf16.msra.mxu0 %v560
  %1398 = vmatpush.bf16.msra.mxu0 %v556
  %1399 = vmatpush.bf16.msra.mxu0 %v552
  %1400 = vmatpush.bf16.msra.mxu0 %v548
  %1401 = vmatpush.bf16.msra.mxu0 %v544
  %1402 = vmatmul.bf16.gmra.mxu0 %v1354
  %v1403 = vpop.f32.mrf.mxu0
  %v1404 = vadd.f32 0.0, %v1403
  %v1405 = vpop.f32.mrf.mxu0
  %1406 = vdwg.mxu0
  %v1407 = vadd.f32 %v1350, %v1365
  %v1408 = vadd.f32 %v1351, %v1378
  %v1409 = vadd.f32 %v1352, %v1391
  %v1410 = vadd.f32 %v1353, %v1404
  %v1411 = vxor.u32 %v1407, 2147483648
  %v1412 = vmul.f32 %v1411, 1.442695
  %v1413 = vpow.pop %v1412
  %v1414 = vadd.f32 %v1413, 1.0
  %v1415 = vrcp.pop %v1414
  %v1416 = vmul.f32 %v1414, %v1415
  %v1417 = vsub.f32 1.0, %v1416
  %v1418 = vmul.f32 %v1415, %v1417
  %v1419 = vadd.f32 %v1415, %v1418
  %vm1420 = vweird.f32 %v1414
  %vm1421 = vweird.f32 %v1415
  %vm1422 = vmor %vm1420, %vm1421
  %v1423 = vsel %vm1422, %v1415, %v1419
  %v1424 = vand.u32 2147483647, %v1414
  %vm1425 = vcmp.eq.f32.partialorder %v1424, 8.507059e+37
  %v1426 = vand.u32 %v1414, 2147483648
  %v1427 = vor.u32 1.1754944e-38, %v1426
  %v1428 = vsel %vm1425, %v1427, %v1423
  %v1429 = vmul.f32 1.0, %v1428
  %v1430 = vxor.u32 %v1408, 2147483648
  %v1431 = vmul.f32 %v1430, 1.442695
  %v1432 = vpow.pop %v1431
  %v1433 = vadd.f32 %v1432, 1.0
  %v1434 = vrcp.pop %v1433
  %v1435 = vmul.f32 %v1433, %v1434
  %v1436 = vsub.f32 1.0, %v1435
  %v1437 = vmul.f32 %v1434, %v1436
  %v1438 = vadd.f32 %v1434, %v1437
  %vm1439 = vweird.f32 %v1433
  %vm1440 = vweird.f32 %v1434
  %vm1441 = vmor %vm1439, %vm1440
  %v1442 = vsel %vm1441, %v1434, %v1438
  %v1443 = vand.u32 2147483647, %v1433
  %vm1444 = vcmp.eq.f32.partialorder %v1443, 8.507059e+37
  %v1445 = vand.u32 %v1433, 2147483648
  %v1446 = vor.u32 1.1754944e-38, %v1445
  %v1447 = vsel %vm1444, %v1446, %v1442
  %v1448 = vmul.f32 1.0, %v1447
  %v1449 = vtanh.pop %v1409
  %v1450 = vxor.u32 %v1410, 2147483648
  %v1451 = vmul.f32 %v1450, 1.442695
  %v1452 = vpow.pop %v1451
  %v1453 = vadd.f32 %v1452, 1.0
  %v1454 = vrcp.pop %v1453
  %v1455 = vmul.f32 %v1453, %v1454
  %v1456 = vsub.f32 1.0, %v1455
  %v1457 = vmul.f32 %v1454, %v1456
  %v1458 = vadd.f32 %v1454, %v1457
  %vm1459 = vweird.f32 %v1453
  %vm1460 = vweird.f32 %v1454
  %vm1461 = vmor %vm1459, %vm1460
  %v1462 = vsel %vm1461, %v1454, %v1458
  %v1463 = vand.u32 2147483647, %v1453
  %vm1464 = vcmp.eq.f32.partialorder %v1463, 8.507059e+37
  %v1465 = vand.u32 %v1453, 2147483648
  %v1466 = vor.u32 1.1754944e-38, %v1465
  %v1467 = vsel %vm1464, %v1466, %v1462
  %v1468 = vmul.f32 1.0, %v1467
  %v1469 = vmul.f32 %v1448, %v1346
  %v1470 = vmul.f32 %v1429, %v1449
  %v1471 = vadd.f32 %v1469, %v1470
  %v1472 = vtanh.pop %v1471
  %v1473 = vmul.f32 %v1468, %v1472
  %s1474 = scalar_lea.vmem [#allocation2], 224
  %v1475 = vld [vmem:[%s1474] sm:$0xff]
  %v1476 = vld [vmem:[%s1474 + $0x8] sm:$0xff]
  %v1477 = vld [vmem:[%s1474 + $0x10] sm:$0xff]
  %v1478 = vld [vmem:[%s1474 + $0x18] sm:$0xff]
  %v1479 = vpack.c.bf16 %v1473, %v1473
  %1480 = vmatpush.bf16.msra.mxu0 %v569
  %1481 = vmatpush.bf16.msra.mxu0 %v565
  %1482 = vmatpush.bf16.msra.mxu0 %v561
  %1483 = vmatpush.bf16.msra.mxu0 %v557
  %1484 = vmatpush.bf16.msra.mxu0 %v553
  %1485 = vmatpush.bf16.msra.mxu0 %v549
  %1486 = vmatpush.bf16.msra.mxu0 %v545
  %1487 = vmatpush.bf16.msra.mxu0 %v541
  %1488 = vmatmul.bf16.gmra.mxu0 %v1479
  %v1489 = vpop.f32.mrf.mxu0
  %v1490 = vadd.f32 0.0, %v1489
  %v1491 = vpop.f32.mrf.mxu0
  %1492 = vdwg.mxu0
  %1493 = vmatpush.bf16.msra.mxu0 %v570
  %1494 = vmatpush.bf16.msra.mxu0 %v566
  %1495 = vmatpush.bf16.msra.mxu0 %v562
  %1496 = vmatpush.bf16.msra.mxu0 %v558
  %1497 = vmatpush.bf16.msra.mxu0 %v554
  %1498 = vmatpush.bf16.msra.mxu0 %v550
  %1499 = vmatpush.bf16.msra.mxu0 %v546
  %1500 = vmatpush.bf16.msra.mxu0 %v542
  %1501 = vmatmul.bf16.gmra.mxu0 %v1479
  %v1502 = vpop.f32.mrf.mxu0
  %v1503 = vadd.f32 0.0, %v1502
  %v1504 = vpop.f32.mrf.mxu0
  %1505 = vdwg.mxu0
  %1506 = vmatpush.bf16.msra.mxu0 %v571
  %1507 = vmatpush.bf16.msra.mxu0 %v567
  %1508 = vmatpush.bf16.msra.mxu0 %v563
  %1509 = vmatpush.bf16.msra.mxu0 %v559
  %1510 = vmatpush.bf16.msra.mxu0 %v555
  %1511 = vmatpush.bf16.msra.mxu0 %v551
  %1512 = vmatpush.bf16.msra.mxu0 %v547
  %1513 = vmatpush.bf16.msra.mxu0 %v543
  %1514 = vmatmul.bf16.gmra.mxu0 %v1479
  %v1515 = vpop.f32.mrf.mxu0
  %v1516 = vadd.f32 0.0, %v1515
  %v1517 = vpop.f32.mrf.mxu0
  %1518 = vdwg.mxu0
  %1519 = vmatpush.bf16.msra.mxu0 %v572
  %1520 = vmatpush.bf16.msra.mxu0 %v568
  %1521 = vmatpush.bf16.msra.mxu0 %v564
  %1522 = vmatpush.bf16.msra.mxu0 %v560
  %1523 = vmatpush.bf16.msra.mxu0 %v556
  %1524 = vmatpush.bf16.msra.mxu0 %v552
  %1525 = vmatpush.bf16.msra.mxu0 %v548
  %1526 = vmatpush.bf16.msra.mxu0 %v544
  %1527 = vmatmul.bf16.gmra.mxu0 %v1479
  %v1528 = vpop.f32.mrf.mxu0
  %v1529 = vadd.f32 0.0, %v1528
  %v1530 = vpop.f32.mrf.mxu0
  %1531 = vdwg.mxu0
  %v1532 = vadd.f32 %v1475, %v1490
  %v1533 = vadd.f32 %v1476, %v1503
  %v1534 = vadd.f32 %v1477, %v1516
  %v1535 = vadd.f32 %v1478, %v1529
  %v1536 = vxor.u32 %v1532, 2147483648
  %v1537 = vmul.f32 %v1536, 1.442695
  %v1538 = vpow.pop %v1537
  %v1539 = vadd.f32 %v1538, 1.0
  %v1540 = vrcp.pop %v1539
  %v1541 = vmul.f32 %v1539, %v1540
  %v1542 = vsub.f32 1.0, %v1541
  %v1543 = vmul.f32 %v1540, %v1542
  %v1544 = vadd.f32 %v1540, %v1543
  %vm1545 = vweird.f32 %v1539
  %vm1546 = vweird.f32 %v1540
  %vm1547 = vmor %vm1545, %vm1546
  %v1548 = vsel %vm1547, %v1540, %v1544
  %v1549 = vand.u32 2147483647, %v1539
  %vm1550 = vcmp.eq.f32.partialorder %v1549, 8.507059e+37
  %v1551 = vand.u32 %v1539, 2147483648
  %v1552 = vor.u32 1.1754944e-38, %v1551
  %v1553 = vsel %vm1550, %v1552, %v1548
  %v1554 = vmul.f32 1.0, %v1553
  %v1555 = vxor.u32 %v1533, 2147483648
  %v1556 = vmul.f32 %v1555, 1.442695
  %v1557 = vpow.pop %v1556
  %v1558 = vadd.f32 %v1557, 1.0
  %v1559 = vrcp.pop %v1558
  %v1560 = vmul.f32 %v1558, %v1559
  %v1561 = vsub.f32 1.0, %v1560
  %v1562 = vmul.f32 %v1559, %v1561
  %v1563 = vadd.f32 %v1559, %v1562
  %vm1564 = vweird.f32 %v1558
  %vm1565 = vweird.f32 %v1559
  %vm1566 = vmor %vm1564, %vm1565
  %v1567 = vsel %vm1566, %v1559, %v1563
  %v1568 = vand.u32 2147483647, %v1558
  %vm1569 = vcmp.eq.f32.partialorder %v1568, 8.507059e+37
  %v1570 = vand.u32 %v1558, 2147483648
  %v1571 = vor.u32 1.1754944e-38, %v1570
  %v1572 = vsel %vm1569, %v1571, %v1567
  %v1573 = vmul.f32 1.0, %v1572
  %v1574 = vtanh.pop %v1534
  %v1575 = vxor.u32 %v1535, 2147483648
  %v1576 = vmul.f32 %v1575, 1.442695
  %v1577 = vpow.pop %v1576
  %v1578 = vadd.f32 %v1577, 1.0
  %v1579 = vrcp.pop %v1578
  %v1580 = vmul.f32 %v1578, %v1579
  %v1581 = vsub.f32 1.0, %v1580
  %v1582 = vmul.f32 %v1579, %v1581
  %v1583 = vadd.f32 %v1579, %v1582
  %vm1584 = vweird.f32 %v1578
  %vm1585 = vweird.f32 %v1579
  %vm1586 = vmor %vm1584, %vm1585
  %v1587 = vsel %vm1586, %v1579, %v1583
  %v1588 = vand.u32 2147483647, %v1578
  %vm1589 = vcmp.eq.f32.partialorder %v1588, 8.507059e+37
  %v1590 = vand.u32 %v1578, 2147483648
  %v1591 = vor.u32 1.1754944e-38, %v1590
  %v1592 = vsel %vm1589, %v1591, %v1587
  %v1593 = vmul.f32 1.0, %v1592
  %v1594 = vmul.f32 %v1573, %v1471
  %v1595 = vmul.f32 %v1554, %v1574
  %v1596 = vadd.f32 %v1594, %v1595
  %v1597 = vtanh.pop %v1596
  %v1598 = vmul.f32 %v1593, %v1597
  %v1599 = vld [vmem:[%s4] sm:$0xff]
  %v1600 = vadd.f32 %v1598, %v1599
  %v1601 = vpack.c.bf16 %v1600, %v1600
  %v1602 = vld [vmem:[%s5] sm:$0xf]
  %v1603 = vld [vmem:[%s5 + $0x4] sm:$0xf]
  %v1604 = vld [vmem:[%s5 + $0x8] sm:$0xf]
  %v1605 = vld [vmem:[%s5 + $0xc] sm:$0xf]
  %v1606 = vld [vmem:[%s5 + $0x10] sm:$0xf]
  %v1607 = vld [vmem:[%s5 + $0x14] sm:$0xf]
  %v1608 = vld [vmem:[%s5 + $0x18] sm:$0xf]
  %v1609 = vld [vmem:[%s5 + $0x1c] sm:$0xf]
  %v1610 = vld [vmem:[%s5 + $0x20] sm:$0xf]
  %v1611 = vld [vmem:[%s5 + $0x24] sm:$0xf]
  %v1612 = vld [vmem:[%s5 + $0x28] sm:$0xf]
  %v1613 = vld [vmem:[%s5 + $0x2c] sm:$0xf]
  %v1614 = vld [vmem:[%s5 + $0x30] sm:$0xf]
  %v1615 = vld [vmem:[%s5 + $0x34] sm:$0xf]
  %v1616 = vld [vmem:[%s5 + $0x38] sm:$0xf]
  %v1617 = vld [vmem:[%s5 + $0x3c] sm:$0xf]
  %v1618 = vld [vmem:[%s6] sm:$0x1]
  %v1620 = vperm.slane %v1618, 0
  %v1638 = vunpack.c.l.b16 %v1602
  %v1639 = vunpack.c.l.b16 %v1603
  %v1640 = vunpack.c.l.b16 %v1604
  %v1641 = vunpack.c.l.b16 %v1605
  %v1642 = vunpack.c.l.b16 %v1606
  %v1643 = vunpack.c.l.b16 %v1607
  %v1644 = vunpack.c.l.b16 %v1608
  %v1645 = vunpack.c.l.b16 %v1609
  %v1646 = vunpack.c.l.b16 %v1610
  %v1647 = vunpack.c.l.b16 %v1611
  %v1648 = vunpack.c.l.b16 %v1612
  %v1649 = vunpack.c.l.b16 %v1613
  %v1650 = vunpack.c.l.b16 %v1614
  %v1651 = vunpack.c.l.b16 %v1615
  %v1652 = vunpack.c.l.b16 %v1616
  %v1653 = vunpack.c.l.b16 %v1617
  %v1654 = vpack.c.b16 %v1639, %v1638
  %v1655 = vpack.c.b16 %v1641, %v1640
  %v1656 = vpack.c.b16 %v1643, %v1642
  %v1657 = vpack.c.b16 %v1645, %v1644
  %v1658 = vpack.c.b16 %v1647, %v1646
  %v1659 = vpack.c.b16 %v1649, %v1648
  %v1660 = vpack.c.b16 %v1651, %v1650
  %v1661 = vpack.c.b16 %v1653, %v1652
  %1670 = vmatpush.bf16.msra.mxu0 %v1661
  %1671 = vmatpush.bf16.msra.mxu0 %v1660
  %1672 = vmatpush.bf16.msra.mxu0 %v1659
  %1673 = vmatpush.bf16.msra.mxu0 %v1658
  %1674 = vmatpush.bf16.msra.mxu0 %v1657
  %1675 = vmatpush.bf16.msra.mxu0 %v1656
  %1676 = vmatpush.bf16.msra.mxu0 %v1655
  %1677 = vmatpush.bf16.msra.mxu0 %v1654
  %1678 = vmatmul.bf16.gmra.mxu0 %v1601
  %v1679 = vpop.f32.mrf.mxu0
  %v1680 = vadd.f32 %v1620, %v1679
  %v1681 = vpop.f32.mrf.mxu0
  %1682 = vdwg.mxu0
  %1683 = vst [vmem:[%s7] sm:$0xff] %v1680
  // Predicated region
  $region30: #{lstm_classifier_forward.1} parent=0 // pred_check
    _
  $region31: #{lstm_classifier_forward.1} parent=0 // pred_check_branch
    %1685 = sbr.rel (0) target = $region33
  $region32: #{lstm_classifier_forward.1} parent=0 // pred_region
    _
  $region33: #{lstm_classifier_forward.1} parent=0 // pred_fallthru
    _
  // Predicated region
  $region34: #{lstm_classifier_forward.1} parent=0 // pred_check
    _
  $region35: #{lstm_classifier_forward.1} parent=0 // pred_check_branch
    %1687 = sbr.rel (0) target = $region37
  $region36: #{lstm_classifier_forward.1} parent=0 // pred_region
    _
  $region37: #{lstm_classifier_forward.1} parent=0 // pred_fallthru
    _

</llo_original>
